<compile_context>
chip_gen: v7x
topology: tpu7x:2x2x1
jax: 0.10.0
libtpu: 0.0.40
codegen_flags: <defaults>
</compile_context>

<pallas_src>
import functools
import math

import jax
import jax.numpy as jnp
from jax.experimental import pallas as pl
from jax.experimental.pallas import tpu as pltpu


def _window_attention_kernel(x_ref, w_qkv_ref, b_qkv_ref, bias_ref,
                             w_proj_ref, b_proj_ref, o_ref, *,
                             num_heads, seq_len):
    """Fused window attention for a block of `wb` windows (wb*N token rows).

    x_ref      : (wb*N, C)   input token rows (f32)
    w_qkv_ref  : (C, 3C)     fused [q|k|v] weight, bf16, q columns pre-scaled
    b_qkv_ref  : (1, 3C)     fused projection bias, f32, q part pre-scaled
    bias_ref   : (H, N, N)   relative-position bias, f32
    w_proj_ref : (C, C)      output projection weight (in, out), bf16
    b_proj_ref : (1, C)      output projection bias, f32
    o_ref      : (wb*N, C)   output
    """
    rows, c = x_ref.shape
    n = seq_len
    wb = rows // n
    h = num_heads
    hd = c // h
    cdt = w_qkv_ref.dtype                       # MXU compute dtype (bf16)

    # Fused q/k/v projection: one (wb*N, C) @ (C, 3C) MXU matmul, f32 acc.
    # `scale` is already folded into the q columns of the weight/bias.
    x2 = x_ref[...].astype(cdt)
    qkv = jnp.dot(x2, w_qkv_ref[...], preferred_element_type=jnp.float32)
    # Single f32 -> bf16 cast right after the bias add (halves the largest
    # in-kernel intermediate); softmax math below stays in f32.
    qkv = (qkv + b_qkv_ref[...]).astype(cdt)    # (wb*N, 3C) bf16

    # Per-head attention core.  Swin window head counts are small, so a
    # static unroll with static lane slices is acceptable here; the per-head
    # output projection was replaced by the head-major concat + single K=C
    # matmul below.
    head_ctx = []
    for head in range(h):                       # static unroll
        off = head * hd
        qh = qkv[:, off:off + hd].reshape(wb, n, hd)
        kh = qkv[:, c + off:c + off + hd].reshape(wb, n, hd)
        vh = qkv[:, 2 * c + off:2 * c + off + hd].reshape(wb, n, hd)

        # Scores + relative-position bias, numerically stable softmax (f32).
        s = jnp.einsum("bqd,bkd->bqk", qh, kh,
                       preferred_element_type=jnp.float32)     # (wb, n, n)
        s = s + bias_ref[head][None, :, :]
        s = s - jnp.max(s, axis=-1, keepdims=True)
        p = jnp.exp(s)
        # Approximate reciprocal runs on the EUP slot instead of a VALU divide.
        p = p * pl.reciprocal(jnp.sum(p, axis=-1, keepdims=True), approx=True)

        oh = jnp.einsum("bqk,bkd->bqd", p.astype(cdt), vh,
                        preferred_element_type=jnp.float32)    # (wb, n, hd)
        head_ctx.append(oh.reshape(rows, hd))

    # Head-major assembly along lanes, then ONE K=C output-projection matmul
    # (instead of H rank-hd matmuls each accumulated with a full VPU pass).
    ctx = jnp.concatenate(head_ctx, axis=-1).astype(cdt)        # (wb*N, C)
    y = jnp.dot(ctx, w_proj_ref[...], preferred_element_type=jnp.float32)
    y = y + b_proj_ref[...]
    o_ref[...] = y.astype(o_ref.dtype)


def _vmem_capacity_bytes():
    """Physical VMEM per core (generation-aware); conservative fallback."""
    try:
        info = pltpu.get_tpu_info()
        cap = getattr(info, "vmem_capacity_bytes", None)
        if cap:
            return int(cap)
    except Exception:
        pass
    return 64 * 1024 * 1024    # safe on every generation (v7x minimum)


def _choose_windows_per_block(B_, N, C, weight_bytes, vmem_limit, x_buffers):
    """Pick windows-per-block so each grid step handles ~512-2048 token rows
    while the whole working set fits the per-chip VMEM budget."""
    per_row = (x_buffers * 4 * C      # streamed x block (f32, multi-buffered)
               + 2 * 4 * C            # streamed out block (double-buffered)
               + 2 * 3 * C            # bf16 qkv intermediate
               + 2 * 4 * N            # per-head scores + probs (f32)
               + 4 * C + 2 * C        # head-context concat (f32 + bf16 copy)
               + 4 * C)               # projected output (f32)
    per_row *= 2                      # headroom for compiler temporaries
    avail = vmem_limit - weight_bytes - (4 << 20)
    max_rows = max(N, avail // per_row) if avail > 0 else N
    target_rows = min(2048, int(max_rows))
    wb = max(1, target_rows // N)
    if B_ >= 2:                       # keep >= 2 grid steps (v7x megacore)
        wb = min(wb, -(-B_ // 2))
    wb = min(wb, max(1, B_))
    # Keep the block's row count sublane-aligned (wb*N % 8 == 0).
    g = 8 // math.gcd(N, 8)
    wb = max(g, (wb // g) * g)
    return wb


def window_attention_forward(x, w_qkv, b_qkv, rel_bias, w_proj, b_proj,
                             *, max_windows_per_block=None):
    """y = WindowAttention(x) with x (B_, N, C); tiled over blocks of windows."""
    B_, N, C = x.shape
    H = rel_bias.shape[0]

    vmem_cap = _vmem_capacity_bytes()
    vmem_limit = int(vmem_cap * 0.75)          # ~96 MiB v5e/v6e, ~48 MiB v7x
    # Deeper input prefetch on the lower-bandwidth v5e/v6e (128 MiB VMEM)
    # parts; default depth 2 on v7x where VMEM is scarcer and HBM faster.
    deep_prefetch = vmem_cap >= (96 << 20)
    x_pipeline = pl.Buffered(3) if deep_prefetch else None
    x_buffers = 3 if deep_prefetch else 2

    weight_bytes = (w_qkv.nbytes + b_qkv.nbytes + rel_bias.nbytes
                    + w_proj.nbytes + b_proj.nbytes)
    wb = _choose_windows_per_block(B_, N, C, weight_bytes, vmem_limit,
                                   x_buffers)
    if max_windows_per_block is not None:
        wb = max(1, min(wb, max_windows_per_block))

    # Pad the window count up to a multiple of wb (never shrink wb to a
    # divisor of B_, which silently degrades to 1 window per grid step).
    num_blocks = -(-B_ // wb)
    Bp = num_blocks * wb

    x2 = x.reshape(B_ * N, C)                  # free contiguous reshape
    if Bp != B_:
        pad = jnp.zeros(((Bp - B_) * N, C), x.dtype)
        x2 = jnp.concatenate([x2, pad], axis=0)

    rows_per_block = wb * N
    kernel = functools.partial(_window_attention_kernel,
                               num_heads=H, seq_len=N)

    flops = (2 * Bp * N * C * (3 * C)          # fused qkv projection
             + 4 * Bp * N * N * C              # q@k^T and attn@v, all heads
             + 2 * Bp * N * C * C)             # output projection
    transcendentals = Bp * H * N * N           # softmax exp
    bytes_accessed = (2 * x2.size * x2.dtype.itemsize + weight_bytes)

    out = pl.pallas_call(
        kernel,
        out_shape=jax.ShapeDtypeStruct((Bp * N, C), x.dtype),
        grid_spec=pltpu.PrefetchScalarGridSpec(
            num_scalar_prefetch=0,
            grid=(num_blocks,),
            in_specs=[
                # Window-row blocks stream across the grid (double/triple buf).
                pl.BlockSpec((rows_per_block, C), lambda i: (i, 0),
                             pipeline_mode=x_pipeline),
                # Weights / biases: constant index_map -> single-buffered,
                # VMEM-resident across grid steps.
                pl.BlockSpec(w_qkv.shape, lambda i: (0, 0),
                             pipeline_mode=pl.Buffered(1)),
                pl.BlockSpec(b_qkv.shape, lambda i: (0, 0),
                             pipeline_mode=pl.Buffered(1)),
                pl.BlockSpec(rel_bias.shape, lambda i: (0, 0, 0),
                             pipeline_mode=pl.Buffered(1)),
                pl.BlockSpec(w_proj.shape, lambda i: (0, 0),
                             pipeline_mode=pl.Buffered(1)),
                pl.BlockSpec(b_proj.shape, lambda i: (0, 0),
                             pipeline_mode=pl.Buffered(1)),
            ],
            out_specs=pl.BlockSpec((rows_per_block, C), lambda i: (i, 0)),
        ),
        compiler_params=pltpu.CompilerParams(
            dimension_semantics=("parallel",),     # megacore sharding on v7x
            vmem_limit_bytes=vmem_limit,
        ),
        cost_estimate=pl.CostEstimate(
            flops=flops, transcendentals=transcendentals,
            bytes_accessed=bytes_accessed),
    )(x2, w_qkv, b_qkv, rel_bias, w_proj, b_proj)

    return out[:B_ * N].reshape(B_, N, C)


class WindowAttentionPallas:
    """JAX/Pallas port of the PyTorch WindowAttention module (eval mode:
    dropout = identity).  Weights stored pre-transposed as (in, out); matmul
    weights in bf16 with the attention scale folded into the q columns;
    biases and the relative-position bias in f32."""

    def __init__(self, dim, win_size, num_heads, qkv_bias=True, key=None,
                 param_dtype=jnp.bfloat16, max_windows_per_block=None):
        assert dim % num_heads == 0, "dim must be divisible by num_heads"
        self.dim = dim
        self.win_size = tuple(win_size)
        self.num_heads = num_heads
        self.head_dim = dim // num_heads           # inner_dim == dim
        self.scale = self.head_dim ** -0.5
        self.max_windows_per_block = max_windows_per_block

        if key is None:
            key = jax.random.PRNGKey(0)
        kq, kkv, kbq, kbkv, kp, kbp, kt = jax.random.split(key, 7)
        bound = 1.0 / math.sqrt(dim)

        def _uni(k, shape):
            return jax.random.uniform(k, shape, jnp.float32,
                                      minval=-bound, maxval=bound)

        w_q = _uni(kq, (dim, dim))                 # == nn.Linear weight^T
        w_kv = _uni(kkv, (dim, 2 * dim))
        if qkv_bias:
            b_q = _uni(kbq, (1, dim))
            b_kv = _uni(kbkv, (1, 2 * dim))
        else:
            b_q = jnp.zeros((1, dim), jnp.float32)
            b_kv = jnp.zeros((1, 2 * dim), jnp.float32)

        # f32 masters (unscaled) -- used by the pure-JAX reference.
        self.w_qkv_f32 = jnp.concatenate([w_q, w_kv], axis=1)
        self.b_qkv_f32 = jnp.concatenate([b_q, b_kv], axis=1)

        # Kernel parameters: fused (C, 3C) weight, columns [q | k | v], each
        # group head-major (matches the PyTorch reshape); `scale` folded into
        # the q columns/bias at init (one-time constant fold).
        self.w_qkv = jnp.concatenate([w_q * self.scale, w_kv],
                                     axis=1).astype(param_dtype)
        self.b_qkv = jnp.concatenate([b_q * self.scale, b_kv], axis=1)  # f32

        self.w_proj_f32 = _uni(kp, (dim, dim))                 # (in, out)
        self.w_proj = self.w_proj_f32.astype(param_dtype)
        self.b_proj = _uni(kbp, (1, dim))                      # f32

        # Relative-position bias table.  (PyTorch initializes it to zeros; use
        # small random values so the bias path is actually exercised.)
        wh, ww = self.win_size
        self.relative_position_bias_table = 0.02 * jax.random.normal(
            kt, ((2 * wh - 1) * (2 * ww - 1), num_heads), jnp.float32)

        coords_h = jnp.arange(wh)
        coords_w = jnp.arange(ww)
        coords = jnp.stack(jnp.meshgrid(coords_h, coords_w, indexing="ij"))
        coords_flatten = coords.reshape(2, -1)
        rel = coords_flatten[:, :, None] - coords_flatten[:, None, :]
        rel = jnp.transpose(rel, (1, 2, 0))
        rel = rel.at[:, :, 0].add(wh - 1)
        rel = rel.at[:, :, 1].add(ww - 1)
        rel = rel.at[:, :, 0].multiply(2 * ww - 1)
        self.relative_position_index = rel.sum(-1).astype(jnp.int32)  # (N, N)

        # (H, N, N) bias gathered/transposed ONCE here (constant per module),
        # instead of re-running the gather as separate XLA ops every forward.
        N = wh * ww
        idx = self.relative_position_index.reshape(-1)
        bias = self.relative_position_bias_table[idx].reshape(N, N, num_heads)
        self.rel_bias = jnp.transpose(bias, (2, 0, 1)).astype(jnp.float32)

    def __call__(self, x, attn_kv=None, mask=None):
        # TODO(synk): cross-attention (attn_kv is not None) and the additive
        # shifted-window mask path are not implemented in the fused kernel.
        assert attn_kv is None and mask is None
        B_, N, C = x.shape
        assert C == self.dim and N == self.win_size[0] * self.win_size[1]
        return window_attention_forward(
            x, self.w_qkv, self.b_qkv, self.rel_bias, self.w_proj, self.b_proj,
            max_windows_per_block=self.max_windows_per_block)


def _reference(x, mod):
    """Pure-JAX f32 reference of the PyTorch WindowAttention forward."""
    B_, N, C = x.shape
    H, hd = mod.num_heads, mod.head_dim
    qkv = x.reshape(B_ * N, C) @ mod.w_qkv_f32 + mod.b_qkv_f32
    qkv = qkv.reshape(B_, N, 3, H, hd).transpose(2, 0, 3, 1, 4)  # (3,B,H,N,hd)
    q, k, v = qkv[0] * mod.scale, qkv[1], qkv[2]
    attn = jnp.einsum("bhqd,bhkd->bhqk", q, k)
    attn = attn + mod.rel_bias[None]
    attn = jax.nn.softmax(attn, axis=-1)
    out = jnp.einsum("bhqk,bhkd->bhqd", attn, v)
    out = out.transpose(0, 2, 1, 3).reshape(B_, N, C)
    return out @ mod.w_proj_f32 + mod.b_proj


if __name__ == "__main__":
    # 2 images of 8x8 tokens split into 2x2 grids of 4x4 windows:
    # B_ = 8 windows, N = 16 tokens per window, C = 32 channels, 4 heads.
    win_size = (4, 4)
    B_, N, dim, num_heads = 8, 16, 32, 4

    key = jax.random.PRNGKey(0)
    kx, kp = jax.random.split(key)
    x = jax.random.normal(kx, (B_, N, dim), jnp.float32)

    mod = WindowAttentionPallas(dim=dim, win_size=win_size,
                                num_heads=num_heads, qkv_bias=True, key=kp)

    y = mod(x)
    jax.block_until_ready(y)
    y_ref = _reference(x, mod)
    assert y.shape == (B_, N, dim)
    err = float(jnp.max(jnp.abs(y - y_ref)))
    # bf16 matmuls (f32 accumulation) + approx reciprocal vs. f32 reference.
    assert err < 5e-2, f"max abs error too large: {err}"

    # Non-divisible window count: exercises the zero-padding path.
    x5 = x[:5]
    y5 = mod(x5)
    jax.block_until_ready(y5)
    err5 = float(jnp.max(jnp.abs(y5 - _reference(x5, mod))))
    assert y5.shape == (5, N, dim)
    assert err5 < 5e-2, f"max abs error (padded case) too large: {err5}"

    print("KERNEL_OK")
</pallas_src>

<mosaic_0001>
module attributes {stable_mosaic.version = 11 : i64} {
  func.func @_window_attention_kernel(%arg0: i32, %arg1: memref<64x32xf32, #tpu.memory_space<vmem>>, %arg2: memref<32x96xbf16, #tpu.memory_space<vmem>>, %arg3: memref<1x96xf32, #tpu.memory_space<vmem>>, %arg4: memref<4x16x16xf32, #tpu.memory_space<vmem>>, %arg5: memref<32x32xbf16, #tpu.memory_space<vmem>>, %arg6: memref<1x32xf32, #tpu.memory_space<vmem>>, %arg7: memref<64x32xf32, #tpu.memory_space<vmem>>) attributes {dimension_semantics = [#tpu.dimension_semantics<parallel>], iteration_bounds = array<i64: 2>, scalar_prefetch = 0 : i64, scratch_operands = 0 : i64, tpu.core_type = #tpu.core_type<tc>, window_params = [{transform_indices = @transform_0, window_bounds = array<i64: 64, 32>}, {pipeline_mode = #tpu.pipeline_mode<synchronous>, transform_indices = @transform_1, window_bounds = array<i64: 32, 96>}, {pipeline_mode = #tpu.pipeline_mode<synchronous>, transform_indices = @transform_2, window_bounds = array<i64: 1, 96>}, {pipeline_mode = #tpu.pipeline_mode<synchronous>, transform_indices = @transform_3, window_bounds = array<i64: 4, 16, 16>}, {pipeline_mode = #tpu.pipeline_mode<synchronous>, transform_indices = @transform_4, window_bounds = array<i64: 32, 32>}, {pipeline_mode = #tpu.pipeline_mode<synchronous>, transform_indices = @transform_5, window_bounds = array<i64: 1, 32>}, {transform_indices = @transform_6, window_bounds = array<i64: 64, 32>}]} {
    %c0 = arith.constant 0 : index
    %c0_0 = arith.constant 0 : index
    %0 = vector.load %arg1[%c0, %c0_0] : memref<64x32xf32, #tpu.memory_space<vmem>>, vector<64x32xf32>
    %1 = arith.truncf %0 : vector<64x32xf32> to vector<64x32xbf16>
    %c0_1 = arith.constant 0 : index
    %c0_2 = arith.constant 0 : index
    %2 = vector.load %arg2[%c0_1, %c0_2] : memref<32x96xbf16, #tpu.memory_space<vmem>>, vector<32x96xbf16>
    %cst = arith.constant dense<0.000000e+00> : vector<64x96xf32>
    %3 = tpu.matmul %1, %2, %cst {dimension_numbers = #tpu.dot_dimension_numbers<[1], [0], [0], [1], [0, 0, 1, 1], [], []>} : vector<64x32xbf16>, vector<32x96xbf16>, vector<64x96xf32> -> vector<64x96xf32>
    %c0_3 = arith.constant 0 : index
    %c0_4 = arith.constant 0 : index
    %4 = vector.load %arg3[%c0_3, %c0_4] : memref<1x96xf32, #tpu.memory_space<vmem>>, vector<1x96xf32>
    %5 = vector.broadcast %4 : vector<1x96xf32> to vector<64x96xf32>
    %6 = arith.addf %3, %5 : vector<64x96xf32>
    %7 = arith.truncf %6 : vector<64x96xf32> to vector<64x96xbf16>
    %8 = vector.extract_strided_slice %7 {offsets = [0, 0], sizes = [64, 8], strides = [1, 1]} : vector<64x96xbf16> to vector<64x8xbf16>
    %9 = vector.shape_cast %8 : vector<64x8xbf16> to vector<4x16x8xbf16>
    %10 = vector.extract_strided_slice %7 {offsets = [0, 32], sizes = [64, 8], strides = [1, 1]} : vector<64x96xbf16> to vector<64x8xbf16>
    %11 = vector.shape_cast %10 : vector<64x8xbf16> to vector<4x16x8xbf16>
    %12 = vector.extract_strided_slice %7 {offsets = [0, 64], sizes = [64, 8], strides = [1, 1]} : vector<64x96xbf16> to vector<64x8xbf16>
    %13 = vector.shape_cast %12 : vector<64x8xbf16> to vector<4x16x8xbf16>
    "tpu.trace_start"() <{level = 10 : i32, message = "bqd,bkd->bqk"}> : () -> ()
    %cst_5 = arith.constant dense<0.000000e+00> : vector<4x16x16xf32>
    %14 = tpu.matmul %9, %11, %cst_5 {dimension_numbers = #tpu.dot_dimension_numbers<[2], [2], [1], [1], [0, 0, 0, 1, 1, 1], [0], [0]>} : vector<4x16x8xbf16>, vector<4x16x8xbf16>, vector<4x16x16xf32> -> vector<4x16x16xf32>
    "tpu.trace_stop"() : () -> ()
    %c0_6 = arith.constant 0 : index
    %c0_7 = arith.constant 0 : index
    %c0_8 = arith.constant 0 : index
    %15 = vector.load %arg4[%c0_6, %c0_7, %c0_8] : memref<4x16x16xf32, #tpu.memory_space<vmem>>, vector<1x16x16xf32>
    %16 = vector.shape_cast %15 : vector<1x16x16xf32> to vector<16x16xf32>
    %17 = vector.shape_cast %16 : vector<16x16xf32> to vector<1x16x16xf32>
    %18 = vector.broadcast %17 : vector<1x16x16xf32> to vector<4x16x16xf32>
    %19 = arith.addf %14, %18 : vector<4x16x16xf32>
    %cst_9 = arith.constant dense<0xFF800000> : vector<4x16xf32>
    %20 = vector.multi_reduction <maximumf>, %19, %cst_9 [2] : vector<4x16x16xf32> to vector<4x16xf32>
    %21 = vector.shape_cast %20 : vector<4x16xf32> to vector<4x16x1xf32>
    %22 = vector.broadcast %21 : vector<4x16x1xf32> to vector<4x16x16xf32>
    %23 = arith.subf %19, %22 : vector<4x16x16xf32>
    %24 = math.exp %23 : vector<4x16x16xf32>
    %cst_10 = arith.constant dense<0.000000e+00> : vector<4x16xf32>
    %25 = vector.multi_reduction <add>, %24, %cst_10 [2] : vector<4x16x16xf32> to vector<4x16xf32>
    %26 = vector.shape_cast %25 : vector<4x16xf32> to vector<4x16x1xf32>
    %27 = tpu.reciprocal %26 {approx = true} : vector<4x16x1xf32> -> vector<4x16x1xf32>
    %28 = vector.broadcast %27 : vector<4x16x1xf32> to vector<4x16x16xf32>
    %29 = arith.mulf %24, %28 : vector<4x16x16xf32>
    %30 = arith.truncf %29 : vector<4x16x16xf32> to vector<4x16x16xbf16>
    "tpu.trace_start"() <{level = 10 : i32, message = "bqk,bkd->bqd"}> : () -> ()
    %cst_11 = arith.constant dense<0.000000e+00> : vector<4x16x8xf32>
    %31 = tpu.matmul %30, %13, %cst_11 {dimension_numbers = #tpu.dot_dimension_numbers<[2], [1], [1], [2], [0, 0, 0, 1, 1, 2], [0], [0]>} : vector<4x16x16xbf16>, vector<4x16x8xbf16>, vector<4x16x8xf32> -> vector<4x16x8xf32>
    "tpu.trace_stop"() : () -> ()
    %32 = vector.shape_cast %31 : vector<4x16x8xf32> to vector<64x8xf32>
    %33 = vector.extract_strided_slice %7 {offsets = [0, 8], sizes = [64, 8], strides = [1, 1]} : vector<64x96xbf16> to vector<64x8xbf16>
    %34 = vector.shape_cast %33 : vector<64x8xbf16> to vector<4x16x8xbf16>
    %35 = vector.extract_strided_slice %7 {offsets = [0, 40], sizes = [64, 8], strides = [1, 1]} : vector<64x96xbf16> to vector<64x8xbf16>
    %36 = vector.shape_cast %35 : vector<64x8xbf16> to vector<4x16x8xbf16>
    %37 = vector.extract_strided_slice %7 {offsets = [0, 72], sizes = [64, 8], strides = [1, 1]} : vector<64x96xbf16> to vector<64x8xbf16>
    %38 = vector.shape_cast %37 : vector<64x8xbf16> to vector<4x16x8xbf16>
    "tpu.trace_start"() <{level = 10 : i32, message = "bqd,bkd->bqk"}> : () -> ()
    %cst_12 = arith.constant dense<0.000000e+00> : vector<4x16x16xf32>
    %39 = tpu.matmul %34, %36, %cst_12 {dimension_numbers = #tpu.dot_dimension_numbers<[2], [2], [1], [1], [0, 0, 0, 1, 1, 1], [0], [0]>} : vector<4x16x8xbf16>, vector<4x16x8xbf16>, vector<4x16x16xf32> -> vector<4x16x16xf32>
    "tpu.trace_stop"() : () -> ()
    %c1 = arith.constant 1 : index
    %c0_13 = arith.constant 0 : index
    %c0_14 = arith.constant 0 : index
    %40 = vector.load %arg4[%c1, %c0_13, %c0_14] : memref<4x16x16xf32, #tpu.memory_space<vmem>>, vector<1x16x16xf32>
    %41 = vector.shape_cast %40 : vector<1x16x16xf32> to vector<16x16xf32>
    %42 = vector.shape_cast %41 : vector<16x16xf32> to vector<1x16x16xf32>
    %43 = vector.broadcast %42 : vector<1x16x16xf32> to vector<4x16x16xf32>
    %44 = arith.addf %39, %43 : vector<4x16x16xf32>
    %cst_15 = arith.constant dense<0xFF800000> : vector<4x16xf32>
    %45 = vector.multi_reduction <maximumf>, %44, %cst_15 [2] : vector<4x16x16xf32> to vector<4x16xf32>
    %46 = vector.shape_cast %45 : vector<4x16xf32> to vector<4x16x1xf32>
    %47 = vector.broadcast %46 : vector<4x16x1xf32> to vector<4x16x16xf32>
    %48 = arith.subf %44, %47 : vector<4x16x16xf32>
    %49 = math.exp %48 : vector<4x16x16xf32>
    %cst_16 = arith.constant dense<0.000000e+00> : vector<4x16xf32>
    %50 = vector.multi_reduction <add>, %49, %cst_16 [2] : vector<4x16x16xf32> to vector<4x16xf32>
    %51 = vector.shape_cast %50 : vector<4x16xf32> to vector<4x16x1xf32>
    %52 = tpu.reciprocal %51 {approx = true} : vector<4x16x1xf32> -> vector<4x16x1xf32>
    %53 = vector.broadcast %52 : vector<4x16x1xf32> to vector<4x16x16xf32>
    %54 = arith.mulf %49, %53 : vector<4x16x16xf32>
    %55 = arith.truncf %54 : vector<4x16x16xf32> to vector<4x16x16xbf16>
    "tpu.trace_start"() <{level = 10 : i32, message = "bqk,bkd->bqd"}> : () -> ()
    %cst_17 = arith.constant dense<0.000000e+00> : vector<4x16x8xf32>
    %56 = tpu.matmul %55, %38, %cst_17 {dimension_numbers = #tpu.dot_dimension_numbers<[2], [1], [1], [2], [0, 0, 0, 1, 1, 2], [0], [0]>} : vector<4x16x16xbf16>, vector<4x16x8xbf16>, vector<4x16x8xf32> -> vector<4x16x8xf32>
    "tpu.trace_stop"() : () -> ()
    %57 = vector.shape_cast %56 : vector<4x16x8xf32> to vector<64x8xf32>
    %58 = vector.extract_strided_slice %7 {offsets = [0, 16], sizes = [64, 8], strides = [1, 1]} : vector<64x96xbf16> to vector<64x8xbf16>
    %59 = vector.shape_cast %58 : vector<64x8xbf16> to vector<4x16x8xbf16>
    %60 = vector.extract_strided_slice %7 {offsets = [0, 48], sizes = [64, 8], strides = [1, 1]} : vector<64x96xbf16> to vector<64x8xbf16>
    %61 = vector.shape_cast %60 : vector<64x8xbf16> to vector<4x16x8xbf16>
    %62 = vector.extract_strided_slice %7 {offsets = [0, 80], sizes = [64, 8], strides = [1, 1]} : vector<64x96xbf16> to vector<64x8xbf16>
    %63 = vector.shape_cast %62 : vector<64x8xbf16> to vector<4x16x8xbf16>
    "tpu.trace_start"() <{level = 10 : i32, message = "bqd,bkd->bqk"}> : () -> ()
    %cst_18 = arith.constant dense<0.000000e+00> : vector<4x16x16xf32>
    %64 = tpu.matmul %59, %61, %cst_18 {dimension_numbers = #tpu.dot_dimension_numbers<[2], [2], [1], [1], [0, 0, 0, 1, 1, 1], [0], [0]>} : vector<4x16x8xbf16>, vector<4x16x8xbf16>, vector<4x16x16xf32> -> vector<4x16x16xf32>
    "tpu.trace_stop"() : () -> ()
    %c2 = arith.constant 2 : index
    %c0_19 = arith.constant 0 : index
    %c0_20 = arith.constant 0 : index
    %65 = vector.load %arg4[%c2, %c0_19, %c0_20] : memref<4x16x16xf32, #tpu.memory_space<vmem>>, vector<1x16x16xf32>
    %66 = vector.shape_cast %65 : vector<1x16x16xf32> to vector<16x16xf32>
    %67 = vector.shape_cast %66 : vector<16x16xf32> to vector<1x16x16xf32>
    %68 = vector.broadcast %67 : vector<1x16x16xf32> to vector<4x16x16xf32>
    %69 = arith.addf %64, %68 : vector<4x16x16xf32>
    %cst_21 = arith.constant dense<0xFF800000> : vector<4x16xf32>
    %70 = vector.multi_reduction <maximumf>, %69, %cst_21 [2] : vector<4x16x16xf32> to vector<4x16xf32>
    %71 = vector.shape_cast %70 : vector<4x16xf32> to vector<4x16x1xf32>
    %72 = vector.broadcast %71 : vector<4x16x1xf32> to vector<4x16x16xf32>
    %73 = arith.subf %69, %72 : vector<4x16x16xf32>
    %74 = math.exp %73 : vector<4x16x16xf32>
    %cst_22 = arith.constant dense<0.000000e+00> : vector<4x16xf32>
    %75 = vector.multi_reduction <add>, %74, %cst_22 [2] : vector<4x16x16xf32> to vector<4x16xf32>
    %76 = vector.shape_cast %75 : vector<4x16xf32> to vector<4x16x1xf32>
    %77 = tpu.reciprocal %76 {approx = true} : vector<4x16x1xf32> -> vector<4x16x1xf32>
    %78 = vector.broadcast %77 : vector<4x16x1xf32> to vector<4x16x16xf32>
    %79 = arith.mulf %74, %78 : vector<4x16x16xf32>
    %80 = arith.truncf %79 : vector<4x16x16xf32> to vector<4x16x16xbf16>
    "tpu.trace_start"() <{level = 10 : i32, message = "bqk,bkd->bqd"}> : () -> ()
    %cst_23 = arith.constant dense<0.000000e+00> : vector<4x16x8xf32>
    %81 = tpu.matmul %80, %63, %cst_23 {dimension_numbers = #tpu.dot_dimension_numbers<[2], [1], [1], [2], [0, 0, 0, 1, 1, 2], [0], [0]>} : vector<4x16x16xbf16>, vector<4x16x8xbf16>, vector<4x16x8xf32> -> vector<4x16x8xf32>
    "tpu.trace_stop"() : () -> ()
    %82 = vector.shape_cast %81 : vector<4x16x8xf32> to vector<64x8xf32>
    %83 = vector.extract_strided_slice %7 {offsets = [0, 24], sizes = [64, 8], strides = [1, 1]} : vector<64x96xbf16> to vector<64x8xbf16>
    %84 = vector.shape_cast %83 : vector<64x8xbf16> to vector<4x16x8xbf16>
    %85 = vector.extract_strided_slice %7 {offsets = [0, 56], sizes = [64, 8], strides = [1, 1]} : vector<64x96xbf16> to vector<64x8xbf16>
    %86 = vector.shape_cast %85 : vector<64x8xbf16> to vector<4x16x8xbf16>
    %87 = vector.extract_strided_slice %7 {offsets = [0, 88], sizes = [64, 8], strides = [1, 1]} : vector<64x96xbf16> to vector<64x8xbf16>
    %88 = vector.shape_cast %87 : vector<64x8xbf16> to vector<4x16x8xbf16>
    "tpu.trace_start"() <{level = 10 : i32, message = "bqd,bkd->bqk"}> : () -> ()
    %cst_24 = arith.constant dense<0.000000e+00> : vector<4x16x16xf32>
    %89 = tpu.matmul %84, %86, %cst_24 {dimension_numbers = #tpu.dot_dimension_numbers<[2], [2], [1], [1], [0, 0, 0, 1, 1, 1], [0], [0]>} : vector<4x16x8xbf16>, vector<4x16x8xbf16>, vector<4x16x16xf32> -> vector<4x16x16xf32>
    "tpu.trace_stop"() : () -> ()
    %c3 = arith.constant 3 : index
    %c0_25 = arith.constant 0 : index
    %c0_26 = arith.constant 0 : index
    %90 = vector.load %arg4[%c3, %c0_25, %c0_26] : memref<4x16x16xf32, #tpu.memory_space<vmem>>, vector<1x16x16xf32>
    %91 = vector.shape_cast %90 : vector<1x16x16xf32> to vector<16x16xf32>
    %92 = vector.shape_cast %91 : vector<16x16xf32> to vector<1x16x16xf32>
    %93 = vector.broadcast %92 : vector<1x16x16xf32> to vector<4x16x16xf32>
    %94 = arith.addf %89, %93 : vector<4x16x16xf32>
    %cst_27 = arith.constant dense<0xFF800000> : vector<4x16xf32>
    %95 = vector.multi_reduction <maximumf>, %94, %cst_27 [2] : vector<4x16x16xf32> to vector<4x16xf32>
    %96 = vector.shape_cast %95 : vector<4x16xf32> to vector<4x16x1xf32>
    %97 = vector.broadcast %96 : vector<4x16x1xf32> to vector<4x16x16xf32>
    %98 = arith.subf %94, %97 : vector<4x16x16xf32>
    %99 = math.exp %98 : vector<4x16x16xf32>
    %cst_28 = arith.constant dense<0.000000e+00> : vector<4x16xf32>
    %100 = vector.multi_reduction <add>, %99, %cst_28 [2] : vector<4x16x16xf32> to vector<4x16xf32>
    %101 = vector.shape_cast %100 : vector<4x16xf32> to vector<4x16x1xf32>
    %102 = tpu.reciprocal %101 {approx = true} : vector<4x16x1xf32> -> vector<4x16x1xf32>
    %103 = vector.broadcast %102 : vector<4x16x1xf32> to vector<4x16x16xf32>
    %104 = arith.mulf %99, %103 : vector<4x16x16xf32>
    %105 = arith.truncf %104 : vector<4x16x16xf32> to vector<4x16x16xbf16>
    "tpu.trace_start"() <{level = 10 : i32, message = "bqk,bkd->bqd"}> : () -> ()
    %cst_29 = arith.constant dense<0.000000e+00> : vector<4x16x8xf32>
    %106 = tpu.matmul %105, %88, %cst_29 {dimension_numbers = #tpu.dot_dimension_numbers<[2], [1], [1], [2], [0, 0, 0, 1, 1, 2], [0], [0]>} : vector<4x16x16xbf16>, vector<4x16x8xbf16>, vector<4x16x8xf32> -> vector<4x16x8xf32>
    "tpu.trace_stop"() : () -> ()
    %107 = vector.shape_cast %106 : vector<4x16x8xf32> to vector<64x8xf32>
    %108 = tpu.concatenate %32, %57, %82, %107 in 1 : vector<64x8xf32>, vector<64x8xf32>, vector<64x8xf32>, vector<64x8xf32> -> vector<64x32xf32>
    %109 = arith.truncf %108 : vector<64x32xf32> to vector<64x32xbf16>
    %c0_30 = arith.constant 0 : index
    %c0_31 = arith.constant 0 : index
    %110 = vector.load %arg5[%c0_30, %c0_31] : memref<32x32xbf16, #tpu.memory_space<vmem>>, vector<32x32xbf16>
    %cst_32 = arith.constant dense<0.000000e+00> : vector<64x32xf32>
    %111 = tpu.matmul %109, %110, %cst_32 {dimension_numbers = #tpu.dot_dimension_numbers<[1], [0], [0], [1], [0, 0, 1, 1], [], []>} : vector<64x32xbf16>, vector<32x32xbf16>, vector<64x32xf32> -> vector<64x32xf32>
    %c0_33 = arith.constant 0 : index
    %c0_34 = arith.constant 0 : index
    %112 = vector.load %arg6[%c0_33, %c0_34] : memref<1x32xf32, #tpu.memory_space<vmem>>, vector<1x32xf32>
    %113 = vector.broadcast %112 : vector<1x32xf32> to vector<64x32xf32>
    %114 = arith.addf %111, %113 : vector<64x32xf32>
    %c0_35 = arith.constant 0 : index
    %c0_36 = arith.constant 0 : index
    %115 = vector.load %arg7[%c0_35, %c0_36] : memref<64x32xf32, #tpu.memory_space<vmem>>, vector<64x32xf32>
    tpu.vector_store %arg7[%c0_35, %c0_36], %114 {strides = array<i32>} : memref<64x32xf32, #tpu.memory_space<vmem>>, vector<64x32xf32>,
    return
  }
  func.func @transform_0(%arg0: i32) -> (i32, i32) {
    %c0_i32 = arith.constant 0 : i32
    %c0_i32_0 = arith.constant 0 : i32
    return %arg0, %c0_i32 : i32, i32
  }
  func.func @transform_1(%arg0: i32) -> (i32, i32) {
    %c0_i32 = arith.constant 0 : i32
    %c0_i32_0 = arith.constant 0 : i32
    %c0_i32_1 = arith.constant 0 : i32
    return %c0_i32, %c0_i32_0 : i32, i32
  }
  func.func @transform_2(%arg0: i32) -> (i32, i32) {
    %c0_i32 = arith.constant 0 : i32
    %c0_i32_0 = arith.constant 0 : i32
    %c0_i32_1 = arith.constant 0 : i32
    return %c0_i32, %c0_i32_0 : i32, i32
  }
  func.func @transform_3(%arg0: i32) -> (i32, i32, i32) {
    %c0_i32 = arith.constant 0 : i32
    %c0_i32_0 = arith.constant 0 : i32
    %c0_i32_1 = arith.constant 0 : i32
    %c0_i32_2 = arith.constant 0 : i32
    return %c0_i32, %c0_i32_0, %c0_i32_1 : i32, i32, i32
  }
  func.func @transform_4(%arg0: i32) -> (i32, i32) {
    %c0_i32 = arith.constant 0 : i32
    %c0_i32_0 = arith.constant 0 : i32
    %c0_i32_1 = arith.constant 0 : i32
    return %c0_i32, %c0_i32_0 : i32, i32
  }
  func.func @transform_5(%arg0: i32) -> (i32, i32) {
    %c0_i32 = arith.constant 0 : i32
    %c0_i32_0 = arith.constant 0 : i32
    %c0_i32_1 = arith.constant 0 : i32
    return %c0_i32, %c0_i32_0 : i32, i32
  }
  func.func @transform_6(%arg0: i32) -> (i32, i32) {
    %c0_i32 = arith.constant 0 : i32
    %c0_i32_0 = arith.constant 0 : i32
    return %arg0, %c0_i32 : i32, i32
  }
}

</mosaic_0001>

<llo_original>
// kernel: tpu_custom_call.1
$region0: #{tpu_custom_call.1}
  #allocation0 [shape = 'u32[]', space=smem, size = 0x4, offset = 0x4, fixed_abs, tag = 'smem constant byte address 0x4 - core index']
  #allocation1 [shape = 'u32[144,128]{1,0:T(1,128)}', space=vmem, size = 0x12000, scoped, tag = 'internal scratch']
  %s0 = inlined_call_operand.vmem [shape: f32[128,32], index: 0, kind: input, shape index: {}]
  %s1 = inlined_call_operand.vmem [shape: bf16[32,96], index: 1, kind: input, shape index: {}]
  %s2 = inlined_call_operand.vmem [shape: f32[1,96], index: 2, kind: input, shape index: {}]
  %s3 = inlined_call_operand.vmem [shape: f32[4,16,16], index: 3, kind: input, shape index: {}]
  %s4 = inlined_call_operand.vmem [shape: bf16[32,32], index: 4, kind: input, shape index: {}]
  %s5 = inlined_call_operand.vmem [shape: f32[1,32], index: 5, kind: input, shape index: {}]
  %s6 = inlined_call_operand.vmem [shape: f32[128,32], index: 6, kind: output, shape index: {}]
  %s7 = sld [smem:[#allocation0]]
  $region57: #{tpu_custom_call.1} parent=0
    _
  %s9 = ssub.s32 1, %s7
  %s10 = scalar_select 0, %s9, %s7
  loop: start=0, step=1, limit=4
  $region2: #{tpu_custom_call.1} parent=0 // loop_pre_header
    _
  $region3: #{tpu_custom_call.1} parent=0 // loop_header
    %s12 = sphi 0, %s16
    %p13 = scmp.ge.s32.totalorder %s12, 4
    %s22 = sphi 0, %s24
    %s25 = sphi 0, %s22
    %s26 = sphi 0, %s25
    %s42 = sphi 0, %s26
    %s46 = sphi 0, %s46
    %s48 = sphi 0, %s46
    %s49 = sphi 0, %s48
    %s63 = sphi 0, %s49
    %s67 = sphi 0, %s67
    %s69 = sphi 0, %s67
    %s70 = sphi 0, %s69
    %s84 = sphi 0, %s70
    %s88 = sphi 0, %s88
    %s90 = sphi 0, %s88
    %s91 = sphi 0, %s90
    %s105 = sphi 0, %s91
    %s109 = sphi 0, %s109
    %s111 = sphi 0, %s109
    %s112 = sphi 0, %s111
    %s126 = sphi 0, %s112
    %s130 = sphi 0, %s130
    %s132 = sphi 0, %s130
    %s133 = sphi 0, %s132
    %s147 = sphi 0, %s133
    %s153 = sphi 0, %s155
    %s156 = sphi 0, %s153
    %s157 = sphi 0, %s156
    %s173 = sphi 0, %s157
  $region4: #{tpu_custom_call.1} parent=0 // loop_header_branch
    %15 = sbr.rel (%p13) target = $region8
  $region5: #{tpu_custom_call.1} parent=0 // loop_body
    %s17 = ssub.s32 %s12, 1
    %s18 = ssub.s32 %s12, 2
    %s19 = sadd.s32 %s12, 1
    %s20 = ssub.s32 %s12, %s19
    %p21 = scmp.eq.s32.totalorder %s20, 0
    %s23 = sadd.s32 %s22, 1
    %s24 = scalar_select %p21, %s22, %s23
    %p27 = pneg %p21
    %p28 = scmp.eq.s32.totalorder %s12, 1
    %p29 = por %p27, %p28
    %p30 = scmp.ne.s32.totalorder %s22, %s25
    %p31 = scmp.eq.s32.totalorder %s12, 0
    %p32 = por %p30, %p31
    %p33 = scmp.ne.s32.totalorder %s22, %s25
    %p34 = scmp.eq.s32.totalorder %s17, 1
    %p35 = por %p33, %p34
    %p36 = scmp.ne.s32.totalorder %s25, %s26
    %p37 = scmp.eq.s32.totalorder %s17, 0
    %p38 = por %p36, %p37
    %p39 = scmp.ne.s32.totalorder %s25, %s26
    %p40 = scmp.eq.s32.totalorder %s18, 1
    %p41 = por %p39, %p40
    %p43 = scmp.ne.s32.totalorder %s26, %s42
    %p44 = scmp.eq.s32.totalorder %s18, 0
    %p45 = por %p43, %p44
    %s47 = sadd.s32 %s46, 1
    %p50 = scmp.eq.s32.totalorder %s12, 1
    %p51 = scmp.ne.s32.totalorder %s46, %s48
    %p52 = scmp.eq.s32.totalorder %s12, 0
    %p53 = por %p51, %p52
    %p54 = scmp.ne.s32.totalorder %s46, %s48
    %p55 = scmp.eq.s32.totalorder %s17, 1
    %p56 = por %p54, %p55
    %p57 = scmp.ne.s32.totalorder %s48, %s49
    %p58 = scmp.eq.s32.totalorder %s17, 0
    %p59 = por %p57, %p58
    %p60 = scmp.ne.s32.totalorder %s48, %s49
    %p61 = scmp.eq.s32.totalorder %s18, 1
    %p62 = por %p60, %p61
    %p64 = scmp.ne.s32.totalorder %s49, %s63
    %p65 = scmp.eq.s32.totalorder %s18, 0
    %p66 = por %p64, %p65
    %s68 = sadd.s32 %s67, 1
    %p71 = scmp.eq.s32.totalorder %s12, 1
    %p72 = scmp.ne.s32.totalorder %s67, %s69
    %p73 = scmp.eq.s32.totalorder %s12, 0
    %p74 = por %p72, %p73
    %p75 = scmp.ne.s32.totalorder %s67, %s69
    %p76 = scmp.eq.s32.totalorder %s17, 1
    %p77 = por %p75, %p76
    %p78 = scmp.ne.s32.totalorder %s69, %s70
    %p79 = scmp.eq.s32.totalorder %s17, 0
    %p80 = por %p78, %p79
    %p81 = scmp.ne.s32.totalorder %s69, %s70
    %p82 = scmp.eq.s32.totalorder %s18, 1
    %p83 = por %p81, %p82
    %p85 = scmp.ne.s32.totalorder %s70, %s84
    %p86 = scmp.eq.s32.totalorder %s18, 0
    %p87 = por %p85, %p86
    %s89 = sadd.s32 %s88, 1
    %p92 = scmp.eq.s32.totalorder %s12, 1
    %p93 = scmp.ne.s32.totalorder %s88, %s90
    %p94 = scmp.eq.s32.totalorder %s12, 0
    %p95 = por %p93, %p94
    %p96 = scmp.ne.s32.totalorder %s88, %s90
    %p97 = scmp.eq.s32.totalorder %s17, 1
    %p98 = por %p96, %p97
    %p99 = scmp.ne.s32.totalorder %s90, %s91
    %p100 = scmp.eq.s32.totalorder %s17, 0
    %p101 = por %p99, %p100
    %p102 = scmp.ne.s32.totalorder %s90, %s91
    %p103 = scmp.eq.s32.totalorder %s18, 1
    %p104 = por %p102, %p103
    %p106 = scmp.ne.s32.totalorder %s91, %s105
    %p107 = scmp.eq.s32.totalorder %s18, 0
    %p108 = por %p106, %p107
    %s110 = sadd.s32 %s109, 1
    %p113 = scmp.eq.s32.totalorder %s12, 1
    %p114 = scmp.ne.s32.totalorder %s109, %s111
    %p115 = scmp.eq.s32.totalorder %s12, 0
    %p116 = por %p114, %p115
    %p117 = scmp.ne.s32.totalorder %s109, %s111
    %p118 = scmp.eq.s32.totalorder %s17, 1
    %p119 = por %p117, %p118
    %p120 = scmp.ne.s32.totalorder %s111, %s112
    %p121 = scmp.eq.s32.totalorder %s17, 0
    %p122 = por %p120, %p121
    %p123 = scmp.ne.s32.totalorder %s111, %s112
    %p124 = scmp.eq.s32.totalorder %s18, 1
    %p125 = por %p123, %p124
    %p127 = scmp.ne.s32.totalorder %s112, %s126
    %p128 = scmp.eq.s32.totalorder %s18, 0
    %p129 = por %p127, %p128
    %s131 = sadd.s32 %s130, 1
    %p134 = scmp.eq.s32.totalorder %s12, 1
    %p135 = scmp.ne.s32.totalorder %s130, %s132
    %p136 = scmp.eq.s32.totalorder %s12, 0
    %p137 = por %p135, %p136
    %p138 = scmp.ne.s32.totalorder %s130, %s132
    %p139 = scmp.eq.s32.totalorder %s17, 1
    %p140 = por %p138, %p139
    %p141 = scmp.ne.s32.totalorder %s132, %s133
    %p142 = scmp.eq.s32.totalorder %s17, 0
    %p143 = por %p141, %p142
    %p144 = scmp.ne.s32.totalorder %s132, %s133
    %p145 = scmp.eq.s32.totalorder %s18, 1
    %p146 = por %p144, %p145
    %p148 = scmp.ne.s32.totalorder %s133, %s147
    %p149 = scmp.eq.s32.totalorder %s18, 0
    %p150 = por %p148, %p149
    %s151 = ssub.s32 %s12, %s19
    %p152 = scmp.eq.s32.totalorder %s151, 0
    %s154 = sadd.s32 %s153, 1
    %s155 = scalar_select %p152, %s153, %s154
    %p158 = pneg %p152
    %p159 = scmp.eq.s32.totalorder %s12, 1
    %p160 = por %p158, %p159
    %p161 = scmp.ne.s32.totalorder %s153, %s156
    %p162 = scmp.eq.s32.totalorder %s12, 0
    %p163 = por %p161, %p162
    %p164 = scmp.ne.s32.totalorder %s153, %s156
    %p165 = scmp.eq.s32.totalorder %s17, 1
    %p166 = por %p164, %p165
    %p167 = scmp.ne.s32.totalorder %s156, %s157
    %p168 = scmp.eq.s32.totalorder %s17, 0
    %p169 = por %p167, %p168
    %p170 = scmp.ne.s32.totalorder %s156, %s157
    %p171 = scmp.eq.s32.totalorder %s18, 1
    %p172 = por %p170, %p171
    %p174 = scmp.ne.s32.totalorder %s157, %s173
    %p175 = scmp.eq.s32.totalorder %s18, 0
    %p176 = por %p174, %p175
    %p177 = scmp.le.s32.totalorder 1, %s12
    %p178 = scmp.lt.s32.totalorder %s12, 3
    %p179 = pnand %p177, %p178
    %p180 = pneg %p179
    // Predicated region
    $region9: #{tpu_custom_call.1} parent=5 // pred_check
      _
    $region10: #{tpu_custom_call.1} parent=5 // pred_check_branch
      %182 = sbr.rel (%p179) target = $region12
    $region11: #{tpu_custom_call.1} parent=5 // pred_region
      %s183 = ssub.s32 %s12, 1
      // Predicated region
      $region13: #{tpu_custom_call.1} parent=11 // pred_check
        %p184 = pneg %p59
      $region14: #{tpu_custom_call.1} parent=11 // pred_check_branch
        %186 = sbr.rel (%p184) target = $region16
      $region15: #{tpu_custom_call.1} parent=11 // pred_region
        _
      $region16: #{tpu_custom_call.1} parent=11 // pred_fallthru
        _
      // Predicated region
      $region17: #{tpu_custom_call.1} parent=11 // pred_check
        %p187 = pneg %p80
      $region18: #{tpu_custom_call.1} parent=11 // pred_check_branch
        %189 = sbr.rel (%p187) target = $region20
      $region19: #{tpu_custom_call.1} parent=11 // pred_region
        _
      $region20: #{tpu_custom_call.1} parent=11 // pred_fallthru
        _
      // Predicated region
      $region21: #{tpu_custom_call.1} parent=11 // pred_check
        %p190 = pneg %p101
      $region22: #{tpu_custom_call.1} parent=11 // pred_check_branch
        %192 = sbr.rel (%p190) target = $region24
      $region23: #{tpu_custom_call.1} parent=11 // pred_region
        _
      $region24: #{tpu_custom_call.1} parent=11 // pred_fallthru
        _
      // Predicated region
      $region25: #{tpu_custom_call.1} parent=11 // pred_check
        %p193 = pneg %p122
      $region26: #{tpu_custom_call.1} parent=11 // pred_check_branch
        %195 = sbr.rel (%p193) target = $region28
      $region27: #{tpu_custom_call.1} parent=11 // pred_region
        _
      $region28: #{tpu_custom_call.1} parent=11 // pred_fallthru
        _
      // Predicated region
      $region29: #{tpu_custom_call.1} parent=11 // pred_check
        %p196 = pneg %p143
      $region30: #{tpu_custom_call.1} parent=11 // pred_check_branch
        %198 = sbr.rel (%p196) target = $region32
      $region31: #{tpu_custom_call.1} parent=11 // pred_region
        _
      $region32: #{tpu_custom_call.1} parent=11 // pred_fallthru
        _
    $region12: #{tpu_custom_call.1} parent=5 // pred_fallthru
      _
    %p199 = scmp.lt.s32.totalorder %s12, 2
    // Predicated region
    $region33: #{tpu_custom_call.1} parent=5 // pred_check
      %p200 = pneg %p199
    $region34: #{tpu_custom_call.1} parent=5 // pred_check_branch
      %202 = sbr.rel (%p200) target = $region36
    $region35: #{tpu_custom_call.1} parent=5 // pred_region
      // Predicated region
      $region37: #{tpu_custom_call.1} parent=35 // pred_check
        %p203 = pneg %p32
      $region38: #{tpu_custom_call.1} parent=35 // pred_check_branch
        %205 = sbr.rel (%p203) target = $region40
      $region39: #{tpu_custom_call.1} parent=35 // pred_region
        %s206 = smul.u32 8, %s12
        %p207 = scmp.lt.s32.totalorder %s206, 15
        %s208 = scalar_select %p207, %s206, 15
        %s209 = smul.addr %s208, 8
        %s210 = scalar_lea.vmem %s0, %s209
        %s211 = smul.u32 8, %s12
      $region40: #{tpu_custom_call.1} parent=35 // pred_fallthru
        _
    $region36: #{tpu_custom_call.1} parent=5 // pred_fallthru
      _
    %p212 = scmp.le.s32.totalorder 1, %s12
    %p213 = scmp.lt.s32.totalorder %s12, 3
    %p214 = pnand %p212, %p213
    %p215 = pneg %p214
    // Predicated region
    $region41: #{tpu_custom_call.1} parent=5 // pred_check
      _
    $region42: #{tpu_custom_call.1} parent=5 // pred_check_branch
      %217 = sbr.rel (%p214) target = $region44
    $region43: #{tpu_custom_call.1} parent=5 // pred_region
      %s218 = ssub.s32 %s12, 1
      %s219 = smul.u32 8, %s17
      %p220 = scmp.lt.s32.totalorder %s219, 15
      %s221 = scalar_select %p220, %s219, 15
      %s222 = smul.addr %s221, 8
      %s223 = scalar_lea.vmem %s0, %s222
      %p224 = pneg %p38
      %p225 = pneg %p35
      %p226 = pneg %p59
      %p227 = pneg %p56
      %p228 = pneg %p80
      %p229 = pneg %p77
      %p230 = pneg %p101
      %p231 = pneg %p98
      %p232 = pneg %p122
      %p233 = pneg %p119
      %p234 = pneg %p143
      %p235 = pneg %p140
      %p236 = pneg %p169
      %p237 = pneg %p166
      %s238 = smul.u32 8, %s17
      %p239 = scmp.lt.s32.totalorder %s238, 15
      %s240 = scalar_select %p239, %s238, 15
      %s241 = smul.addr %s240, 8
      %s242 = scalar_lea.vmem %s6, %s241
      %s243 = smul.u32 8, %s17
      %p244 = scmp.lt.s32.totalorder %s243, 15
      %s245 = scalar_select %p244, %s243, 15
      %s246 = smul.addr %s245, 8
      %s247 = scalar_lea.vmem %s0, %s246
      %s248 = smul.u32 8, %s17
      %s249 = smul.u32 8, %s17
      %p250 = scmp.lt.s32.totalorder %s249, 15
      %s251 = scalar_select %p250, %s249, 15
      %s252 = smul.addr %s251, 8
      %s253 = scalar_lea.vmem %s6, %s252
      %s254 = smul.u32 8, %s17
      %v256 = vld [vmem:[%s247] sm:$0xff]
      %v257 = vld [vmem:[%s247 + $0x8] sm:$0xff]
      %v258 = vld [vmem:[%s247 + $0x10] sm:$0xff]
      %v259 = vld [vmem:[%s247 + $0x18] sm:$0xff]
      %v260 = vld [vmem:[%s247 + $0x20] sm:$0xff]
      %v261 = vld [vmem:[%s247 + $0x28] sm:$0xff]
      %v262 = vld [vmem:[%s247 + $0x30] sm:$0xff]
      %v263 = vld [vmem:[%s247 + $0x38] sm:$0xff]
      %v264 = vpack.c.bf16 %v257, %v256
      %v265 = vpack.c.bf16 %v259, %v258
      %v266 = vpack.c.bf16 %v261, %v260
      %v267 = vpack.c.bf16 %v263, %v262
      %v268 = vld [vmem:[%s1] sm:$0xf]
      %v269 = vld [vmem:[%s1 + $0x4] sm:$0xf]
      %v270 = vld [vmem:[%s1 + $0x8] sm:$0xf]
      %v271 = vld [vmem:[%s1 + $0xc] sm:$0xf]
      %v272 = vld [vmem:[%s2] sm:$0x1]
      %v274 = vlaneseq
      %v275 = vshrl.u32 %v274, 7
      %v276 = vsub.s32 0, %v275
      %v277 = vrot.slane %v272, %v276
      %v283 = vunpack.c.l.b16 %v268
      %v284 = vunpack.c.l.b16 %v269
      %v285 = vunpack.c.l.b16 %v270
      %v286 = vunpack.c.l.b16 %v271
      %v287 = vpack.c.b16 %v284, %v283
      %v288 = vpack.c.b16 %v286, %v285
      %vm291 = vcmask 261120
      %v293 = vsel %vm291, %v264, 0
      %v296 = vsel %vm291, %v265, 0
      %v299 = vsel %vm291, %v266, 0
      %v302 = vsel %vm291, %v267, 0
      %304 = vmatprep.subr.bf16.mxu0 0
      %305 = vmatpush1.bf16.msra.mxu0 %v287
      %306 = vmatprep.subr.bf16.mxu0 0
      %307 = vmatpush1.bf16.msra.mxu0 %v288
      %308 = vmatprep.subr.bf16.mxu0 0
      %309 = vmatpush1.bf16.msra.mxu0 0
      %310 = vmatprep.subr.bf16.mxu0 0
      %311 = vmatpush1.bf16.msra.mxu0 0
      %312 = vmatprep.subr.bf16.mxu0 0
      %313 = vmatpush1.bf16.msra.mxu0 0
      %314 = vmatprep.subr.bf16.mxu0 0
      %315 = vmatpush1.bf16.msra.mxu0 0
      %316 = vmatprep.subr.bf16.mxu0 0
      %317 = vmatpush1.bf16.msra.mxu0 0
      %318 = vmatprep.subr.bf16.mxu0 0
      %319 = vmatpush1.bf16.msra.mxu0 0
      %320 = vmatprep.subr.bf16.mxu0 0
      %321 = vmatpush1.bf16.msra.mxu0 0
      %322 = vmatprep.subr.bf16.mxu0 0
      %323 = vmatpush1.bf16.msra.mxu0 0
      %324 = vmatprep.subr.bf16.mxu0 0
      %325 = vmatpush1.bf16.msra.mxu0 0
      %326 = vmatprep.subr.bf16.mxu0 0
      %327 = vmatpush1.bf16.msra.mxu0 0
      %328 = vmatprep.subr.bf16.mxu0 0
      %329 = vmatpush1.bf16.msra.mxu0 0
      %330 = vmatprep.subr.bf16.mxu0 0
      %331 = vmatpush1.bf16.msra.mxu0 0
      %332 = vmatprep.subr.bf16.mxu0 0
      %333 = vmatpush1.bf16.msra.mxu0 0
      %334 = vmatprep.subr.bf16.mxu0 0
      %335 = vmatpush1.bf16.msra.mxu0 0
      %336 = vmatprep.mubr.bf16.mxu0 0
      %337 = vmatmul.mubr.bf16.gmra.mrb[0].mxu0 %v293
      %v338 = vpop.f32.mrb[0].mxu0
      %v339 = vadd.f32 %v277, %v338
      %v340 = vpop.f32.mrb[0].mxu0
      %v341 = vpop.f32.mrb[0].mxu0
      %v342 = vadd.f32 %v277, %v341
      %v343 = vpop.f32.mrb[0].mxu0
      %344 = vmatprep.mubr.bf16.mxu0 0
      %345 = vmatmul.mubr.bf16.gmra.mrb[0].mxu0 %v296
      %v346 = vpop.f32.mrb[0].mxu0
      %v347 = vadd.f32 %v277, %v346
      %v348 = vpop.f32.mrb[0].mxu0
      %v349 = vpop.f32.mrb[0].mxu0
      %v350 = vadd.f32 %v277, %v349
      %v351 = vpop.f32.mrb[0].mxu0
      %352 = vmatprep.mubr.bf16.mxu0 0
      %353 = vmatmul.mubr.bf16.gmra.mrb[0].mxu0 %v299
      %v354 = vpop.f32.mrb[0].mxu0
      %v355 = vadd.f32 %v277, %v354
      %v356 = vpop.f32.mrb[0].mxu0
      %v357 = vpop.f32.mrb[0].mxu0
      %v358 = vadd.f32 %v277, %v357
      %v359 = vpop.f32.mrb[0].mxu0
      %360 = vmatprep.mubr.bf16.mxu0 0
      %361 = vmatmul.mubr.bf16.gmra.mrb[0].mxu0 %v302
      %v362 = vpop.f32.mrb[0].mxu0
      %v363 = vadd.f32 %v277, %v362
      %v364 = vpop.f32.mrb[0].mxu0
      %v365 = vpop.f32.mrb[0].mxu0
      %v366 = vadd.f32 %v277, %v365
      %v367 = vpop.f32.mrb[0].mxu0
      %368 = vdwg.mxu0
      %v369 = vpack.c.bf16 %v342, %v339
      %v370 = vpack.c.bf16 %v350, %v347
      %v371 = vpack.c.bf16 %v358, %v355
      %v372 = vpack.c.bf16 %v366, %v363
      %v373 = vld [vmem:[%s3] sm:$0xff]
      %v374 = vld [vmem:[%s3 + $0x8] sm:$0xff]
      %376 = vrot.lane.b32.xlu0 %v369, 96
      %v377 = vpop.permute.xlu0 %376
      %vm378 = vcmask 64512
      %v380 = vsel %vm378, %v369, 0
      %v383 = vsel %vm378, %v377, 0
      %385 = vmatprep.subr.bf16.mxu0 0
      %386 = vmatpush1.bf16.xpose.msra.mxu0 %v383
      %387 = vmatprep.subr.bf16.mxu0 0
      %388 = vmatpush1.bf16.xpose.msra.mxu0 0
      %389 = vmatprep.subr.bf16.mxu0 0
      %390 = vmatpush1.bf16.xpose.msra.mxu0 0
      %391 = vmatprep.subr.bf16.mxu0 0
      %392 = vmatpush1.bf16.xpose.msra.mxu0 0
      %393 = vmatprep.subr.bf16.mxu0 0
      %394 = vmatpush1.bf16.xpose.msra.mxu0 0
      %395 = vmatprep.subr.bf16.mxu0 0
      %396 = vmatpush1.bf16.xpose.msra.mxu0 0
      %397 = vmatprep.subr.bf16.mxu0 0
      %398 = vmatpush1.bf16.xpose.msra.mxu0 0
      %399 = vmatprep.subr.bf16.mxu0 0
      %400 = vmatpush1.bf16.xpose.msra.mxu0 0
      %401 = vmatprep.subr.bf16.mxu0 0
      %402 = vmatpush1.bf16.xpose.msra.mxu0 0
      %403 = vmatprep.subr.bf16.mxu0 0
      %404 = vmatpush1.bf16.xpose.msra.mxu0 0
      %405 = vmatprep.subr.bf16.mxu0 0
      %406 = vmatpush1.bf16.xpose.msra.mxu0 0
      %407 = vmatprep.subr.bf16.mxu0 0
      %408 = vmatpush1.bf16.xpose.msra.mxu0 0
      %409 = vmatprep.subr.bf16.mxu0 0
      %410 = vmatpush1.bf16.xpose.msra.mxu0 0
      %411 = vmatprep.subr.bf16.mxu0 0
      %412 = vmatpush1.bf16.xpose.msra.mxu0 0
      %413 = vmatprep.subr.bf16.mxu0 0
      %414 = vmatpush1.bf16.xpose.msra.mxu0 0
      %415 = vmatprep.subr.bf16.mxu0 0
      %416 = vmatpush1.bf16.xpose.msra.mxu0 0
      %417 = vmatprep.mubr.bf16.mxu0 0
      %418 = vmatmul.mubr.bf16.gmra.mrb[0].mxu0 %v380
      %v419 = vpop.f32.mrb[0].mxu0
      %v420 = vadd.f32 %v373, %v419
      %v421 = vpop.f32.mrb[0].mxu0
      %v422 = vpop.f32.mrb[0].mxu0
      %v423 = vadd.f32 %v374, %v422
      %v424 = vpop.f32.mrb[0].mxu0
      %425 = vdwg.mxu0
      %427 = vrot.lane.b32.xlu0 %v370, 96
      %v428 = vpop.permute.xlu0 %427
      %v430 = vsel %vm378, %v370, 0
      %v433 = vsel %vm378, %v428, 0
      %435 = vmatprep.subr.bf16.mxu0 0
      %436 = vmatpush1.bf16.xpose.msra.mxu0 %v433
      %437 = vmatprep.subr.bf16.mxu0 0
      %438 = vmatpush1.bf16.xpose.msra.mxu0 0
      %439 = vmatprep.subr.bf16.mxu0 0
      %440 = vmatpush1.bf16.xpose.msra.mxu0 0
      %441 = vmatprep.subr.bf16.mxu0 0
      %442 = vmatpush1.bf16.xpose.msra.mxu0 0
      %443 = vmatprep.subr.bf16.mxu0 0
      %444 = vmatpush1.bf16.xpose.msra.mxu0 0
      %445 = vmatprep.subr.bf16.mxu0 0
      %446 = vmatpush1.bf16.xpose.msra.mxu0 0
      %447 = vmatprep.subr.bf16.mxu0 0
      %448 = vmatpush1.bf16.xpose.msra.mxu0 0
      %449 = vmatprep.subr.bf16.mxu0 0
      %450 = vmatpush1.bf16.xpose.msra.mxu0 0
      %451 = vmatprep.subr.bf16.mxu0 0
      %452 = vmatpush1.bf16.xpose.msra.mxu0 0
      %453 = vmatprep.subr.bf16.mxu0 0
      %454 = vmatpush1.bf16.xpose.msra.mxu0 0
      %455 = vmatprep.subr.bf16.mxu0 0
      %456 = vmatpush1.bf16.xpose.msra.mxu0 0
      %457 = vmatprep.subr.bf16.mxu0 0
      %458 = vmatpush1.bf16.xpose.msra.mxu0 0
      %459 = vmatprep.subr.bf16.mxu0 0
      %460 = vmatpush1.bf16.xpose.msra.mxu0 0
      %461 = vmatprep.subr.bf16.mxu0 0
      %462 = vmatpush1.bf16.xpose.msra.mxu0 0
      %463 = vmatprep.subr.bf16.mxu0 0
      %464 = vmatpush1.bf16.xpose.msra.mxu0 0
      %465 = vmatprep.subr.bf16.mxu0 0
      %466 = vmatpush1.bf16.xpose.msra.mxu0 0
      %467 = vmatprep.mubr.bf16.mxu0 0
      %468 = vmatmul.mubr.bf16.gmra.mrb[0].mxu0 %v430
      %v469 = vpop.f32.mrb[0].mxu0
      %v470 = vadd.f32 %v373, %v469
      %v471 = vpop.f32.mrb[0].mxu0
      %v472 = vpop.f32.mrb[0].mxu0
      %v473 = vadd.f32 %v374, %v472
      %v474 = vpop.f32.mrb[0].mxu0
      %475 = vdwg.mxu0
      %477 = vrot.lane.b32.xlu0 %v371, 96
      %v478 = vpop.permute.xlu0 %477
      %v480 = vsel %vm378, %v371, 0
      %v483 = vsel %vm378, %v478, 0
      %485 = vmatprep.subr.bf16.mxu0 0
      %486 = vmatpush1.bf16.xpose.msra.mxu0 %v483
      %487 = vmatprep.subr.bf16.mxu0 0
      %488 = vmatpush1.bf16.xpose.msra.mxu0 0
      %489 = vmatprep.subr.bf16.mxu0 0
      %490 = vmatpush1.bf16.xpose.msra.mxu0 0
      %491 = vmatprep.subr.bf16.mxu0 0
      %492 = vmatpush1.bf16.xpose.msra.mxu0 0
      %493 = vmatprep.subr.bf16.mxu0 0
      %494 = vmatpush1.bf16.xpose.msra.mxu0 0
      %495 = vmatprep.subr.bf16.mxu0 0
      %496 = vmatpush1.bf16.xpose.msra.mxu0 0
      %497 = vmatprep.subr.bf16.mxu0 0
      %498 = vmatpush1.bf16.xpose.msra.mxu0 0
      %499 = vmatprep.subr.bf16.mxu0 0
      %500 = vmatpush1.bf16.xpose.msra.mxu0 0
      %501 = vmatprep.subr.bf16.mxu0 0
      %502 = vmatpush1.bf16.xpose.msra.mxu0 0
      %503 = vmatprep.subr.bf16.mxu0 0
      %504 = vmatpush1.bf16.xpose.msra.mxu0 0
      %505 = vmatprep.subr.bf16.mxu0 0
      %506 = vmatpush1.bf16.xpose.msra.mxu0 0
      %507 = vmatprep.subr.bf16.mxu0 0
      %508 = vmatpush1.bf16.xpose.msra.mxu0 0
      %509 = vmatprep.subr.bf16.mxu0 0
      %510 = vmatpush1.bf16.xpose.msra.mxu0 0
      %511 = vmatprep.subr.bf16.mxu0 0
      %512 = vmatpush1.bf16.xpose.msra.mxu0 0
      %513 = vmatprep.subr.bf16.mxu0 0
      %514 = vmatpush1.bf16.xpose.msra.mxu0 0
      %515 = vmatprep.subr.bf16.mxu0 0
      %516 = vmatpush1.bf16.xpose.msra.mxu0 0
      %517 = vmatprep.mubr.bf16.mxu0 0
      %518 = vmatmul.mubr.bf16.gmra.mrb[0].mxu0 %v480
      %v519 = vpop.f32.mrb[0].mxu0
      %v520 = vadd.f32 %v373, %v519
      %v521 = vpop.f32.mrb[0].mxu0
      %v522 = vpop.f32.mrb[0].mxu0
      %v523 = vadd.f32 %v374, %v522
      %v524 = vpop.f32.mrb[0].mxu0
      %525 = vdwg.mxu0
      %527 = vrot.lane.b32.xlu0 %v372, 96
      %v528 = vpop.permute.xlu0 %527
      %v530 = vsel %vm378, %v372, 0
      %v533 = vsel %vm378, %v528, 0
      %535 = vmatprep.subr.bf16.mxu0 0
      %536 = vmatpush1.bf16.xpose.msra.mxu0 %v533
      %537 = vmatprep.subr.bf16.mxu0 0
      %538 = vmatpush1.bf16.xpose.msra.mxu0 0
      %539 = vmatprep.subr.bf16.mxu0 0
      %540 = vmatpush1.bf16.xpose.msra.mxu0 0
      %541 = vmatprep.subr.bf16.mxu0 0
      %542 = vmatpush1.bf16.xpose.msra.mxu0 0
      %543 = vmatprep.subr.bf16.mxu0 0
      %544 = vmatpush1.bf16.xpose.msra.mxu0 0
      %545 = vmatprep.subr.bf16.mxu0 0
      %546 = vmatpush1.bf16.xpose.msra.mxu0 0
      %547 = vmatprep.subr.bf16.mxu0 0
      %548 = vmatpush1.bf16.xpose.msra.mxu0 0
      %549 = vmatprep.subr.bf16.mxu0 0
      %550 = vmatpush1.bf16.xpose.msra.mxu0 0
      %551 = vmatprep.subr.bf16.mxu0 0
      %552 = vmatpush1.bf16.xpose.msra.mxu0 0
      %553 = vmatprep.subr.bf16.mxu0 0
      %554 = vmatpush1.bf16.xpose.msra.mxu0 0
      %555 = vmatprep.subr.bf16.mxu0 0
      %556 = vmatpush1.bf16.xpose.msra.mxu0 0
      %557 = vmatprep.subr.bf16.mxu0 0
      %558 = vmatpush1.bf16.xpose.msra.mxu0 0
      %559 = vmatprep.subr.bf16.mxu0 0
      %560 = vmatpush1.bf16.xpose.msra.mxu0 0
      %561 = vmatprep.subr.bf16.mxu0 0
      %562 = vmatpush1.bf16.xpose.msra.mxu0 0
      %563 = vmatprep.subr.bf16.mxu0 0
      %564 = vmatpush1.bf16.xpose.msra.mxu0 0
      %565 = vmatprep.subr.bf16.mxu0 0
      %566 = vmatpush1.bf16.xpose.msra.mxu0 0
      %567 = vmatprep.mubr.bf16.mxu0 0
      %568 = vmatmul.mubr.bf16.gmra.mrb[0].mxu0 %v530
      %v569 = vpop.f32.mrb[0].mxu0
      %v570 = vadd.f32 %v373, %v569
      %v571 = vpop.f32.mrb[0].mxu0
      %v572 = vpop.f32.mrb[0].mxu0
      %v573 = vadd.f32 %v374, %v572
      %v574 = vpop.f32.mrb[0].mxu0
      %575 = vdwg.mxu0
      %vm576 = vcmask 130048
      %v577 = vsel %vm576, %v420, -inf
      %578 = vmax.xlane.f32.xlu0 %v577
      %v579 = vpop.xlane.xlu0 %578
      %v580 = vsel %vm576, %v423, -inf
      %581 = vmax.xlane.f32.xlu0 %v580
      %v582 = vpop.xlane.xlu0 %581
      %v583 = vsel %vm576, %v470, -inf
      %584 = vmax.xlane.f32.xlu0 %v583
      %v585 = vpop.xlane.xlu0 %584
      %v586 = vsel %vm576, %v473, -inf
      %587 = vmax.xlane.f32.xlu0 %v586
      %v588 = vpop.xlane.xlu0 %587
      %v589 = vsel %vm576, %v520, -inf
      %590 = vmax.xlane.f32.xlu0 %v589
      %v591 = vpop.xlane.xlu0 %590
      %v592 = vsel %vm576, %v523, -inf
      %593 = vmax.xlane.f32.xlu0 %v592
      %v594 = vpop.xlane.xlu0 %593
      %v595 = vsel %vm576, %v570, -inf
      %596 = vmax.xlane.f32.xlu0 %v595
      %v597 = vpop.xlane.xlu0 %596
      %v598 = vsel %vm576, %v573, -inf
      %599 = vmax.xlane.f32.xlu0 %v598
      %v600 = vpop.xlane.xlu0 %599
      %v601 = vsub.f32 %v420, %v579
      %v602 = vsub.f32 %v423, %v582
      %v603 = vsub.f32 %v470, %v585
      %v604 = vsub.f32 %v473, %v588
      %v605 = vsub.f32 %v520, %v591
      %v606 = vsub.f32 %v523, %v594
      %v607 = vsub.f32 %v570, %v597
      %v608 = vsub.f32 %v573, %v600
      %v609 = vmul.f32 %v601, 1.442695
      %v610 = vpow.pop %v609
      %v611 = vmul.f32 %v602, 1.442695
      %v612 = vpow.pop %v611
      %v613 = vmul.f32 %v603, 1.442695
      %v614 = vpow.pop %v613
      %v615 = vmul.f32 %v604, 1.442695
      %v616 = vpow.pop %v615
      %v617 = vmul.f32 %v605, 1.442695
      %v618 = vpow.pop %v617
      %v619 = vmul.f32 %v606, 1.442695
      %v620 = vpow.pop %v619
      %v621 = vmul.f32 %v607, 1.442695
      %v622 = vpow.pop %v621
      %v623 = vmul.f32 %v608, 1.442695
      %v624 = vpow.pop %v623
      %v625 = vsel %vm576, %v610, 0.0
      %626 = vadd.xlane.f32.xlu0 %v625
      %v627 = vpop.xlane.xlu0 %626
      %v628 = vsel %vm576, %v612, 0.0
      %629 = vadd.xlane.f32.xlu0 %v628
      %v630 = vpop.xlane.xlu0 %629
      %v631 = vsel %vm576, %v614, 0.0
      %632 = vadd.xlane.f32.xlu0 %v631
      %v633 = vpop.xlane.xlu0 %632
      %v634 = vsel %vm576, %v616, 0.0
      %635 = vadd.xlane.f32.xlu0 %v634
      %v636 = vpop.xlane.xlu0 %635
      %v637 = vsel %vm576, %v618, 0.0
      %638 = vadd.xlane.f32.xlu0 %v637
      %v639 = vpop.xlane.xlu0 %638
      %v640 = vsel %vm576, %v620, 0.0
      %641 = vadd.xlane.f32.xlu0 %v640
      %v642 = vpop.xlane.xlu0 %641
      %v643 = vsel %vm576, %v622, 0.0
      %644 = vadd.xlane.f32.xlu0 %v643
      %v645 = vpop.xlane.xlu0 %644
      %v646 = vsel %vm576, %v624, 0.0
      %647 = vadd.xlane.f32.xlu0 %v646
      %v648 = vpop.xlane.xlu0 %647
      %v649 = vrcp.pop %v627
      %v650 = vrcp.pop %v630
      %v651 = vrcp.pop %v633
      %v652 = vrcp.pop %v636
      %v653 = vrcp.pop %v639
      %v654 = vrcp.pop %v642
      %v655 = vrcp.pop %v645
      %v656 = vrcp.pop %v648
      %v657 = vmul.f32 %v610, %v649
      %v658 = vmul.f32 %v612, %v650
      %v659 = vmul.f32 %v614, %v651
      %v660 = vmul.f32 %v616, %v652
      %v661 = vmul.f32 %v618, %v653
      %v662 = vmul.f32 %v620, %v654
      %v663 = vmul.f32 %v622, %v655
      %v664 = vmul.f32 %v624, %v656
      %v665 = vpack.c.bf16 %v658, %v657
      %v666 = vpack.c.bf16 %v660, %v659
      %v667 = vpack.c.bf16 %v662, %v661
      %v668 = vpack.c.bf16 %v664, %v663
      %669 = vrot.lane.b32.xlu0 %v369, 64
      %v670 = vpop.permute.xlu0 %669
      %v673 = vsel %vm576, %v665, 0
      %675 = vmatprep.subr.bf16.mxu0 0
      %676 = vmatpush1.bf16.msra.mxu0 %v670
      %677 = vmatprep.subr.bf16.mxu0 0
      %678 = vmatpush1.bf16.msra.mxu0 0
      %679 = vmatprep.subr.bf16.mxu0 0
      %680 = vmatpush1.bf16.msra.mxu0 0
      %681 = vmatprep.subr.bf16.mxu0 0
      %682 = vmatpush1.bf16.msra.mxu0 0
      %683 = vmatprep.subr.bf16.mxu0 0
      %684 = vmatpush1.bf16.msra.mxu0 0
      %685 = vmatprep.subr.bf16.mxu0 0
      %686 = vmatpush1.bf16.msra.mxu0 0
      %687 = vmatprep.subr.bf16.mxu0 0
      %688 = vmatpush1.bf16.msra.mxu0 0
      %689 = vmatprep.subr.bf16.mxu0 0
      %690 = vmatpush1.bf16.msra.mxu0 0
      %691 = vmatprep.subr.bf16.mxu0 0
      %692 = vmatpush1.bf16.msra.mxu0 0
      %693 = vmatprep.subr.bf16.mxu0 0
      %694 = vmatpush1.bf16.msra.mxu0 0
      %695 = vmatprep.subr.bf16.mxu0 0
      %696 = vmatpush1.bf16.msra.mxu0 0
      %697 = vmatprep.subr.bf16.mxu0 0
      %698 = vmatpush1.bf16.msra.mxu0 0
      %699 = vmatprep.subr.bf16.mxu0 0
      %700 = vmatpush1.bf16.msra.mxu0 0
      %701 = vmatprep.subr.bf16.mxu0 0
      %702 = vmatpush1.bf16.msra.mxu0 0
      %703 = vmatprep.subr.bf16.mxu0 0
      %704 = vmatpush1.bf16.msra.mxu0 0
      %705 = vmatprep.subr.bf16.mxu0 0
      %706 = vmatpush1.bf16.msra.mxu0 0
      %707 = vmatprep.mubr.bf16.mxu0 0
      %708 = vmatmul.mubr.bf16.gmra.mrb[0].mxu0 %v673
      %v709 = vpop.f32.mrb[0].mxu0
      %v710 = vadd.f32 0.0, %v709
      %v711 = vpop.f32.mrb[0].mxu0
      %v712 = vpop.f32.mrb[0].mxu0
      %v713 = vadd.f32 0.0, %v712
      %v714 = vpop.f32.mrb[0].mxu0
      %715 = vdwg.mxu0
      %716 = vrot.lane.b32.xlu0 %v370, 64
      %v717 = vpop.permute.xlu0 %716
      %v720 = vsel %vm576, %v666, 0
      %722 = vmatprep.subr.bf16.mxu0 0
      %723 = vmatpush1.bf16.msra.mxu0 %v717
      %724 = vmatprep.subr.bf16.mxu0 0
      %725 = vmatpush1.bf16.msra.mxu0 0
      %726 = vmatprep.subr.bf16.mxu0 0
      %727 = vmatpush1.bf16.msra.mxu0 0
      %728 = vmatprep.subr.bf16.mxu0 0
      %729 = vmatpush1.bf16.msra.mxu0 0
      %730 = vmatprep.subr.bf16.mxu0 0
      %731 = vmatpush1.bf16.msra.mxu0 0
      %732 = vmatprep.subr.bf16.mxu0 0
      %733 = vmatpush1.bf16.msra.mxu0 0
      %734 = vmatprep.subr.bf16.mxu0 0
      %735 = vmatpush1.bf16.msra.mxu0 0
      %736 = vmatprep.subr.bf16.mxu0 0
      %737 = vmatpush1.bf16.msra.mxu0 0
      %738 = vmatprep.subr.bf16.mxu0 0
      %739 = vmatpush1.bf16.msra.mxu0 0
      %740 = vmatprep.subr.bf16.mxu0 0
      %741 = vmatpush1.bf16.msra.mxu0 0
      %742 = vmatprep.subr.bf16.mxu0 0
      %743 = vmatpush1.bf16.msra.mxu0 0
      %744 = vmatprep.subr.bf16.mxu0 0
      %745 = vmatpush1.bf16.msra.mxu0 0
      %746 = vmatprep.subr.bf16.mxu0 0
      %747 = vmatpush1.bf16.msra.mxu0 0
      %748 = vmatprep.subr.bf16.mxu0 0
      %749 = vmatpush1.bf16.msra.mxu0 0
      %750 = vmatprep.subr.bf16.mxu0 0
      %751 = vmatpush1.bf16.msra.mxu0 0
      %752 = vmatprep.subr.bf16.mxu0 0
      %753 = vmatpush1.bf16.msra.mxu0 0
      %754 = vmatprep.mubr.bf16.mxu0 0
      %755 = vmatmul.mubr.bf16.gmra.mrb[0].mxu0 %v720
      %v756 = vpop.f32.mrb[0].mxu0
      %v757 = vadd.f32 0.0, %v756
      %v758 = vpop.f32.mrb[0].mxu0
      %v759 = vpop.f32.mrb[0].mxu0
      %v760 = vadd.f32 0.0, %v759
      %v761 = vpop.f32.mrb[0].mxu0
      %762 = vdwg.mxu0
      %763 = vrot.lane.b32.xlu0 %v371, 64
      %v764 = vpop.permute.xlu0 %763
      %v767 = vsel %vm576, %v667, 0
      %769 = vmatprep.subr.bf16.mxu0 0
      %770 = vmatpush1.bf16.msra.mxu0 %v764
      %771 = vmatprep.subr.bf16.mxu0 0
      %772 = vmatpush1.bf16.msra.mxu0 0
      %773 = vmatprep.subr.bf16.mxu0 0
      %774 = vmatpush1.bf16.msra.mxu0 0
      %775 = vmatprep.subr.bf16.mxu0 0
      %776 = vmatpush1.bf16.msra.mxu0 0
      %777 = vmatprep.subr.bf16.mxu0 0
      %778 = vmatpush1.bf16.msra.mxu0 0
      %779 = vmatprep.subr.bf16.mxu0 0
      %780 = vmatpush1.bf16.msra.mxu0 0
      %781 = vmatprep.subr.bf16.mxu0 0
      %782 = vmatpush1.bf16.msra.mxu0 0
      %783 = vmatprep.subr.bf16.mxu0 0
      %784 = vmatpush1.bf16.msra.mxu0 0
      %785 = vmatprep.subr.bf16.mxu0 0
      %786 = vmatpush1.bf16.msra.mxu0 0
      %787 = vmatprep.subr.bf16.mxu0 0
      %788 = vmatpush1.bf16.msra.mxu0 0
      %789 = vmatprep.subr.bf16.mxu0 0
      %790 = vmatpush1.bf16.msra.mxu0 0
      %791 = vmatprep.subr.bf16.mxu0 0
      %792 = vmatpush1.bf16.msra.mxu0 0
      %793 = vmatprep.subr.bf16.mxu0 0
      %794 = vmatpush1.bf16.msra.mxu0 0
      %795 = vmatprep.subr.bf16.mxu0 0
      %796 = vmatpush1.bf16.msra.mxu0 0
      %797 = vmatprep.subr.bf16.mxu0 0
      %798 = vmatpush1.bf16.msra.mxu0 0
      %799 = vmatprep.subr.bf16.mxu0 0
      %800 = vmatpush1.bf16.msra.mxu0 0
      %801 = vmatprep.mubr.bf16.mxu0 0
      %802 = vmatmul.mubr.bf16.gmra.mrb[0].mxu0 %v767
      %v803 = vpop.f32.mrb[0].mxu0
      %v804 = vadd.f32 0.0, %v803
      %v805 = vpop.f32.mrb[0].mxu0
      %v806 = vpop.f32.mrb[0].mxu0
      %v807 = vadd.f32 0.0, %v806
      %v808 = vpop.f32.mrb[0].mxu0
      %809 = vdwg.mxu0
      %810 = vrot.lane.b32.xlu0 %v372, 64
      %v811 = vpop.permute.xlu0 %810
      %v814 = vsel %vm576, %v668, 0
      %816 = vmatprep.subr.bf16.mxu0 0
      %817 = vmatpush1.bf16.msra.mxu0 %v811
      %818 = vmatprep.subr.bf16.mxu0 0
      %819 = vmatpush1.bf16.msra.mxu0 0
      %820 = vmatprep.subr.bf16.mxu0 0
      %821 = vmatpush1.bf16.msra.mxu0 0
      %822 = vmatprep.subr.bf16.mxu0 0
      %823 = vmatpush1.bf16.msra.mxu0 0
      %824 = vmatprep.subr.bf16.mxu0 0
      %825 = vmatpush1.bf16.msra.mxu0 0
      %826 = vmatprep.subr.bf16.mxu0 0
      %827 = vmatpush1.bf16.msra.mxu0 0
      %828 = vmatprep.subr.bf16.mxu0 0
      %829 = vmatpush1.bf16.msra.mxu0 0
      %830 = vmatprep.subr.bf16.mxu0 0
      %831 = vmatpush1.bf16.msra.mxu0 0
      %832 = vmatprep.subr.bf16.mxu0 0
      %833 = vmatpush1.bf16.msra.mxu0 0
      %834 = vmatprep.subr.bf16.mxu0 0
      %835 = vmatpush1.bf16.msra.mxu0 0
      %836 = vmatprep.subr.bf16.mxu0 0
      %837 = vmatpush1.bf16.msra.mxu0 0
      %838 = vmatprep.subr.bf16.mxu0 0
      %839 = vmatpush1.bf16.msra.mxu0 0
      %840 = vmatprep.subr.bf16.mxu0 0
      %841 = vmatpush1.bf16.msra.mxu0 0
      %842 = vmatprep.subr.bf16.mxu0 0
      %843 = vmatpush1.bf16.msra.mxu0 0
      %844 = vmatprep.subr.bf16.mxu0 0
      %845 = vmatpush1.bf16.msra.mxu0 0
      %846 = vmatprep.subr.bf16.mxu0 0
      %847 = vmatpush1.bf16.msra.mxu0 0
      %848 = vmatprep.mubr.bf16.mxu0 0
      %849 = vmatmul.mubr.bf16.gmra.mrb[0].mxu0 %v814
      %v850 = vpop.f32.mrb[0].mxu0
      %v851 = vadd.f32 0.0, %v850
      %v852 = vpop.f32.mrb[0].mxu0
      %v853 = vpop.f32.mrb[0].mxu0
      %v854 = vadd.f32 0.0, %v853
      %v855 = vpop.f32.mrb[0].mxu0
      %856 = vdwg.mxu0
      %s857 = scalar_lea.vmem %s3, 16
      %v858 = vld [vmem:[%s857] sm:$0xff]
      %v859 = vld [vmem:[%s857 + $0x8] sm:$0xff]
      %860 = vrot.lane.b32.xlu0 %v369, 120
      %v861 = vpop.permute.xlu0 %860
      %862 = vrot.lane.b32.xlu0 %v369, 88
      %v863 = vpop.permute.xlu0 %862
      %v865 = vsel %vm378, %v861, 0
      %v868 = vsel %vm378, %v863, 0
      %870 = vmatprep.subr.bf16.mxu0 0
      %871 = vmatpush1.bf16.xpose.msra.mxu0 %v868
      %872 = vmatprep.subr.bf16.mxu0 0
      %873 = vmatpush1.bf16.xpose.msra.mxu0 0
      %874 = vmatprep.subr.bf16.mxu0 0
      %875 = vmatpush1.bf16.xpose.msra.mxu0 0
      %876 = vmatprep.subr.bf16.mxu0 0
      %877 = vmatpush1.bf16.xpose.msra.mxu0 0
      %878 = vmatprep.subr.bf16.mxu0 0
      %879 = vmatpush1.bf16.xpose.msra.mxu0 0
      %880 = vmatprep.subr.bf16.mxu0 0
      %881 = vmatpush1.bf16.xpose.msra.mxu0 0
      %882 = vmatprep.subr.bf16.mxu0 0
      %883 = vmatpush1.bf16.xpose.msra.mxu0 0
      %884 = vmatprep.subr.bf16.mxu0 0
      %885 = vmatpush1.bf16.xpose.msra.mxu0 0
      %886 = vmatprep.subr.bf16.mxu0 0
      %887 = vmatpush1.bf16.xpose.msra.mxu0 0
      %888 = vmatprep.subr.bf16.mxu0 0
      %889 = vmatpush1.bf16.xpose.msra.mxu0 0
      %890 = vmatprep.subr.bf16.mxu0 0
      %891 = vmatpush1.bf16.xpose.msra.mxu0 0
      %892 = vmatprep.subr.bf16.mxu0 0
      %893 = vmatpush1.bf16.xpose.msra.mxu0 0
      %894 = vmatprep.subr.bf16.mxu0 0
      %895 = vmatpush1.bf16.xpose.msra.mxu0 0
      %896 = vmatprep.subr.bf16.mxu0 0
      %897 = vmatpush1.bf16.xpose.msra.mxu0 0
      %898 = vmatprep.subr.bf16.mxu0 0
      %899 = vmatpush1.bf16.xpose.msra.mxu0 0
      %900 = vmatprep.subr.bf16.mxu0 0
      %901 = vmatpush1.bf16.xpose.msra.mxu0 0
      %902 = vmatprep.mubr.bf16.mxu0 0
      %903 = vmatmul.mubr.bf16.gmra.mrb[0].mxu0 %v865
      %v904 = vpop.f32.mrb[0].mxu0
      %v905 = vadd.f32 %v858, %v904
      %v906 = vpop.f32.mrb[0].mxu0
      %v907 = vpop.f32.mrb[0].mxu0
      %v908 = vadd.f32 %v859, %v907
      %v909 = vpop.f32.mrb[0].mxu0
      %910 = vdwg.mxu0
      %911 = vrot.lane.b32.xlu0 %v370, 120
      %v912 = vpop.permute.xlu0 %911
      %913 = vrot.lane.b32.xlu0 %v370, 88
      %v914 = vpop.permute.xlu0 %913
      %v916 = vsel %vm378, %v912, 0
      %v919 = vsel %vm378, %v914, 0
      %921 = vmatprep.subr.bf16.mxu0 0
      %922 = vmatpush1.bf16.xpose.msra.mxu0 %v919
      %923 = vmatprep.subr.bf16.mxu0 0
      %924 = vmatpush1.bf16.xpose.msra.mxu0 0
      %925 = vmatprep.subr.bf16.mxu0 0
      %926 = vmatpush1.bf16.xpose.msra.mxu0 0
      %927 = vmatprep.subr.bf16.mxu0 0
      %928 = vmatpush1.bf16.xpose.msra.mxu0 0
      %929 = vmatprep.subr.bf16.mxu0 0
      %930 = vmatpush1.bf16.xpose.msra.mxu0 0
      %931 = vmatprep.subr.bf16.mxu0 0
      %932 = vmatpush1.bf16.xpose.msra.mxu0 0
      %933 = vmatprep.subr.bf16.mxu0 0
      %934 = vmatpush1.bf16.xpose.msra.mxu0 0
      %935 = vmatprep.subr.bf16.mxu0 0
      %936 = vmatpush1.bf16.xpose.msra.mxu0 0
      %937 = vmatprep.subr.bf16.mxu0 0
      %938 = vmatpush1.bf16.xpose.msra.mxu0 0
      %939 = vmatprep.subr.bf16.mxu0 0
      %940 = vmatpush1.bf16.xpose.msra.mxu0 0
      %941 = vmatprep.subr.bf16.mxu0 0
      %942 = vmatpush1.bf16.xpose.msra.mxu0 0
      %943 = vmatprep.subr.bf16.mxu0 0
      %944 = vmatpush1.bf16.xpose.msra.mxu0 0
      %945 = vmatprep.subr.bf16.mxu0 0
      %946 = vmatpush1.bf16.xpose.msra.mxu0 0
      %947 = vmatprep.subr.bf16.mxu0 0
      %948 = vmatpush1.bf16.xpose.msra.mxu0 0
      %949 = vmatprep.subr.bf16.mxu0 0
      %950 = vmatpush1.bf16.xpose.msra.mxu0 0
      %951 = vmatprep.subr.bf16.mxu0 0
      %952 = vmatpush1.bf16.xpose.msra.mxu0 0
      %953 = vmatprep.mubr.bf16.mxu0 0
      %954 = vmatmul.mubr.bf16.gmra.mrb[0].mxu0 %v916
      %v955 = vpop.f32.mrb[0].mxu0
      %v956 = vadd.f32 %v858, %v955
      %v957 = vpop.f32.mrb[0].mxu0
      %v958 = vpop.f32.mrb[0].mxu0
      %v959 = vadd.f32 %v859, %v958
      %v960 = vpop.f32.mrb[0].mxu0
      %961 = vdwg.mxu0
      %962 = vrot.lane.b32.xlu0 %v371, 120
      %v963 = vpop.permute.xlu0 %962
      %964 = vrot.lane.b32.xlu0 %v371, 88
      %v965 = vpop.permute.xlu0 %964
      %v967 = vsel %vm378, %v963, 0
      %v970 = vsel %vm378, %v965, 0
      %972 = vmatprep.subr.bf16.mxu0 0
      %973 = vmatpush1.bf16.xpose.msra.mxu0 %v970
      %974 = vmatprep.subr.bf16.mxu0 0
      %975 = vmatpush1.bf16.xpose.msra.mxu0 0
      %976 = vmatprep.subr.bf16.mxu0 0
      %977 = vmatpush1.bf16.xpose.msra.mxu0 0
      %978 = vmatprep.subr.bf16.mxu0 0
      %979 = vmatpush1.bf16.xpose.msra.mxu0 0
      %980 = vmatprep.subr.bf16.mxu0 0
      %981 = vmatpush1.bf16.xpose.msra.mxu0 0
      %982 = vmatprep.subr.bf16.mxu0 0
      %983 = vmatpush1.bf16.xpose.msra.mxu0 0
      %984 = vmatprep.subr.bf16.mxu0 0
      %985 = vmatpush1.bf16.xpose.msra.mxu0 0
      %986 = vmatprep.subr.bf16.mxu0 0
      %987 = vmatpush1.bf16.xpose.msra.mxu0 0
      %988 = vmatprep.subr.bf16.mxu0 0
      %989 = vmatpush1.bf16.xpose.msra.mxu0 0
      %990 = vmatprep.subr.bf16.mxu0 0
      %991 = vmatpush1.bf16.xpose.msra.mxu0 0
      %992 = vmatprep.subr.bf16.mxu0 0
      %993 = vmatpush1.bf16.xpose.msra.mxu0 0
      %994 = vmatprep.subr.bf16.mxu0 0
      %995 = vmatpush1.bf16.xpose.msra.mxu0 0
      %996 = vmatprep.subr.bf16.mxu0 0
      %997 = vmatpush1.bf16.xpose.msra.mxu0 0
      %998 = vmatprep.subr.bf16.mxu0 0
      %999 = vmatpush1.bf16.xpose.msra.mxu0 0
      %1000 = vmatprep.subr.bf16.mxu0 0
      %1001 = vmatpush1.bf16.xpose.msra.mxu0 0
      %1002 = vmatprep.subr.bf16.mxu0 0
      %1003 = vmatpush1.bf16.xpose.msra.mxu0 0
      %1004 = vmatprep.mubr.bf16.mxu0 0
      %1005 = vmatmul.mubr.bf16.gmra.mrb[0].mxu0 %v967
      %v1006 = vpop.f32.mrb[0].mxu0
      %v1007 = vadd.f32 %v858, %v1006
      %v1008 = vpop.f32.mrb[0].mxu0
      %v1009 = vpop.f32.mrb[0].mxu0
      %v1010 = vadd.f32 %v859, %v1009
      %v1011 = vpop.f32.mrb[0].mxu0
      %1012 = vdwg.mxu0
      %1013 = vrot.lane.b32.xlu0 %v372, 120
      %v1014 = vpop.permute.xlu0 %1013
      %1015 = vrot.lane.b32.xlu0 %v372, 88
      %v1016 = vpop.permute.xlu0 %1015
      %v1018 = vsel %vm378, %v1014, 0
      %v1021 = vsel %vm378, %v1016, 0
      %1023 = vmatprep.subr.bf16.mxu0 0
      %1024 = vmatpush1.bf16.xpose.msra.mxu0 %v1021
      %1025 = vmatprep.subr.bf16.mxu0 0
      %1026 = vmatpush1.bf16.xpose.msra.mxu0 0
      %1027 = vmatprep.subr.bf16.mxu0 0
      %1028 = vmatpush1.bf16.xpose.msra.mxu0 0
      %1029 = vmatprep.subr.bf16.mxu0 0
      %1030 = vmatpush1.bf16.xpose.msra.mxu0 0
      %1031 = vmatprep.subr.bf16.mxu0 0
      %1032 = vmatpush1.bf16.xpose.msra.mxu0 0
      %1033 = vmatprep.subr.bf16.mxu0 0
      %1034 = vmatpush1.bf16.xpose.msra.mxu0 0
      %1035 = vmatprep.subr.bf16.mxu0 0
      %1036 = vmatpush1.bf16.xpose.msra.mxu0 0
      %1037 = vmatprep.subr.bf16.mxu0 0
      %1038 = vmatpush1.bf16.xpose.msra.mxu0 0
      %1039 = vmatprep.subr.bf16.mxu0 0
      %1040 = vmatpush1.bf16.xpose.msra.mxu0 0
      %1041 = vmatprep.subr.bf16.mxu0 0
      %1042 = vmatpush1.bf16.xpose.msra.mxu0 0
      %1043 = vmatprep.subr.bf16.mxu0 0
      %1044 = vmatpush1.bf16.xpose.msra.mxu0 0
      %1045 = vmatprep.subr.bf16.mxu0 0
      %1046 = vmatpush1.bf16.xpose.msra.mxu0 0
      %1047 = vmatprep.subr.bf16.mxu0 0
      %1048 = vmatpush1.bf16.xpose.msra.mxu0 0
      %1049 = vmatprep.subr.bf16.mxu0 0
      %1050 = vmatpush1.bf16.xpose.msra.mxu0 0
      %1051 = vmatprep.subr.bf16.mxu0 0
      %1052 = vmatpush1.bf16.xpose.msra.mxu0 0
      %1053 = vmatprep.subr.bf16.mxu0 0
      %1054 = vmatpush1.bf16.xpose.msra.mxu0 0
      %1055 = vmatprep.mubr.bf16.mxu0 0
      %1056 = vmatmul.mubr.bf16.gmra.mrb[0].mxu0 %v1018
      %v1057 = vpop.f32.mrb[0].mxu0
      %v1058 = vadd.f32 %v858, %v1057
      %v1059 = vpop.f32.mrb[0].mxu0
      %v1060 = vpop.f32.mrb[0].mxu0
      %v1061 = vadd.f32 %v859, %v1060
      %v1062 = vpop.f32.mrb[0].mxu0
      %1063 = vdwg.mxu0
      %v1064 = vsel %vm576, %v905, -inf
      %1065 = vmax.xlane.f32.xlu0 %v1064
      %v1066 = vpop.xlane.xlu0 %1065
      %v1067 = vsel %vm576, %v908, -inf
      %1068 = vmax.xlane.f32.xlu0 %v1067
      %v1069 = vpop.xlane.xlu0 %1068
      %v1070 = vsel %vm576, %v956, -inf
      %1071 = vmax.xlane.f32.xlu0 %v1070
      %v1072 = vpop.xlane.xlu0 %1071
      %v1073 = vsel %vm576, %v959, -inf
      %1074 = vmax.xlane.f32.xlu0 %v1073
      %v1075 = vpop.xlane.xlu0 %1074
      %v1076 = vsel %vm576, %v1007, -inf
      %1077 = vmax.xlane.f32.xlu0 %v1076
      %v1078 = vpop.xlane.xlu0 %1077
      %v1079 = vsel %vm576, %v1010, -inf
      %1080 = vmax.xlane.f32.xlu0 %v1079
      %v1081 = vpop.xlane.xlu0 %1080
      %v1082 = vsel %vm576, %v1058, -inf
      %1083 = vmax.xlane.f32.xlu0 %v1082
      %v1084 = vpop.xlane.xlu0 %1083
      %v1085 = vsel %vm576, %v1061, -inf
      %1086 = vmax.xlane.f32.xlu0 %v1085
      %v1087 = vpop.xlane.xlu0 %1086
      %v1088 = vsub.f32 %v905, %v1066
      %v1089 = vsub.f32 %v908, %v1069
      %v1090 = vsub.f32 %v956, %v1072
      %v1091 = vsub.f32 %v959, %v1075
      %v1092 = vsub.f32 %v1007, %v1078
      %v1093 = vsub.f32 %v1010, %v1081
      %v1094 = vsub.f32 %v1058, %v1084
      %v1095 = vsub.f32 %v1061, %v1087
      %v1096 = vmul.f32 %v1088, 1.442695
      %v1097 = vpow.pop %v1096
      %v1098 = vmul.f32 %v1089, 1.442695
      %v1099 = vpow.pop %v1098
      %v1100 = vmul.f32 %v1090, 1.442695
      %v1101 = vpow.pop %v1100
      %v1102 = vmul.f32 %v1091, 1.442695
      %v1103 = vpow.pop %v1102
      %v1104 = vmul.f32 %v1092, 1.442695
      %v1105 = vpow.pop %v1104
      %v1106 = vmul.f32 %v1093, 1.442695
      %v1107 = vpow.pop %v1106
      %v1108 = vmul.f32 %v1094, 1.442695
      %v1109 = vpow.pop %v1108
      %v1110 = vmul.f32 %v1095, 1.442695
      %v1111 = vpow.pop %v1110
      %v1112 = vsel %vm576, %v1097, 0.0
      %1113 = vadd.xlane.f32.xlu0 %v1112
      %v1114 = vpop.xlane.xlu0 %1113
      %v1115 = vsel %vm576, %v1099, 0.0
      %1116 = vadd.xlane.f32.xlu0 %v1115
      %v1117 = vpop.xlane.xlu0 %1116
      %v1118 = vsel %vm576, %v1101, 0.0
      %1119 = vadd.xlane.f32.xlu0 %v1118
      %v1120 = vpop.xlane.xlu0 %1119
      %v1121 = vsel %vm576, %v1103, 0.0
      %1122 = vadd.xlane.f32.xlu0 %v1121
      %v1123 = vpop.xlane.xlu0 %1122
      %v1124 = vsel %vm576, %v1105, 0.0
      %1125 = vadd.xlane.f32.xlu0 %v1124
      %v1126 = vpop.xlane.xlu0 %1125
      %v1127 = vsel %vm576, %v1107, 0.0
      %1128 = vadd.xlane.f32.xlu0 %v1127
      %v1129 = vpop.xlane.xlu0 %1128
      %v1130 = vsel %vm576, %v1109, 0.0
      %1131 = vadd.xlane.f32.xlu0 %v1130
      %v1132 = vpop.xlane.xlu0 %1131
      %v1133 = vsel %vm576, %v1111, 0.0
      %1134 = vadd.xlane.f32.xlu0 %v1133
      %v1135 = vpop.xlane.xlu0 %1134
      %v1136 = vrcp.pop %v1114
      %v1137 = vrcp.pop %v1117
      %v1138 = vrcp.pop %v1120
      %v1139 = vrcp.pop %v1123
      %v1140 = vrcp.pop %v1126
      %v1141 = vrcp.pop %v1129
      %v1142 = vrcp.pop %v1132
      %v1143 = vrcp.pop %v1135
      %v1144 = vmul.f32 %v1097, %v1136
      %v1145 = vmul.f32 %v1099, %v1137
      %v1146 = vmul.f32 %v1101, %v1138
      %v1147 = vmul.f32 %v1103, %v1139
      %v1148 = vmul.f32 %v1105, %v1140
      %v1149 = vmul.f32 %v1107, %v1141
      %v1150 = vmul.f32 %v1109, %v1142
      %v1151 = vmul.f32 %v1111, %v1143
      %v1152 = vpack.c.bf16 %v1145, %v1144
      %v1153 = vpack.c.bf16 %v1147, %v1146
      %v1154 = vpack.c.bf16 %v1149, %v1148
      %v1155 = vpack.c.bf16 %v1151, %v1150
      %1156 = vrot.lane.b32.xlu0 %v369, 56
      %v1157 = vpop.permute.xlu0 %1156
      %v1160 = vsel %vm576, %v1152, 0
      %1162 = vmatprep.subr.bf16.mxu0 0
      %1163 = vmatpush1.bf16.msra.mxu0 %v1157
      %1164 = vmatprep.subr.bf16.mxu0 0
      %1165 = vmatpush1.bf16.msra.mxu0 0
      %1166 = vmatprep.subr.bf16.mxu0 0
      %1167 = vmatpush1.bf16.msra.mxu0 0
      %1168 = vmatprep.subr.bf16.mxu0 0
      %1169 = vmatpush1.bf16.msra.mxu0 0
      %1170 = vmatprep.subr.bf16.mxu0 0
      %1171 = vmatpush1.bf16.msra.mxu0 0
      %1172 = vmatprep.subr.bf16.mxu0 0
      %1173 = vmatpush1.bf16.msra.mxu0 0
      %1174 = vmatprep.subr.bf16.mxu0 0
      %1175 = vmatpush1.bf16.msra.mxu0 0
      %1176 = vmatprep.subr.bf16.mxu0 0
      %1177 = vmatpush1.bf16.msra.mxu0 0
      %1178 = vmatprep.subr.bf16.mxu0 0
      %1179 = vmatpush1.bf16.msra.mxu0 0
      %1180 = vmatprep.subr.bf16.mxu0 0
      %1181 = vmatpush1.bf16.msra.mxu0 0
      %1182 = vmatprep.subr.bf16.mxu0 0
      %1183 = vmatpush1.bf16.msra.mxu0 0
      %1184 = vmatprep.subr.bf16.mxu0 0
      %1185 = vmatpush1.bf16.msra.mxu0 0
      %1186 = vmatprep.subr.bf16.mxu0 0
      %1187 = vmatpush1.bf16.msra.mxu0 0
      %1188 = vmatprep.subr.bf16.mxu0 0
      %1189 = vmatpush1.bf16.msra.mxu0 0
      %1190 = vmatprep.subr.bf16.mxu0 0
      %1191 = vmatpush1.bf16.msra.mxu0 0
      %1192 = vmatprep.subr.bf16.mxu0 0
      %1193 = vmatpush1.bf16.msra.mxu0 0
      %1194 = vmatprep.mubr.bf16.mxu0 0
      %1195 = vmatmul.mubr.bf16.gmra.mrb[0].mxu0 %v1160
      %v1196 = vpop.f32.mrb[0].mxu0
      %v1197 = vadd.f32 0.0, %v1196
      %v1198 = vpop.f32.mrb[0].mxu0
      %v1199 = vpop.f32.mrb[0].mxu0
      %v1200 = vadd.f32 0.0, %v1199
      %v1201 = vpop.f32.mrb[0].mxu0
      %1202 = vdwg.mxu0
      %1203 = vrot.lane.b32.xlu0 %v370, 56
      %v1204 = vpop.permute.xlu0 %1203
      %v1207 = vsel %vm576, %v1153, 0
      %1209 = vmatprep.subr.bf16.mxu0 0
      %1210 = vmatpush1.bf16.msra.mxu0 %v1204
      %1211 = vmatprep.subr.bf16.mxu0 0
      %1212 = vmatpush1.bf16.msra.mxu0 0
      %1213 = vmatprep.subr.bf16.mxu0 0
      %1214 = vmatpush1.bf16.msra.mxu0 0
      %1215 = vmatprep.subr.bf16.mxu0 0
      %1216 = vmatpush1.bf16.msra.mxu0 0
      %1217 = vmatprep.subr.bf16.mxu0 0
      %1218 = vmatpush1.bf16.msra.mxu0 0
      %1219 = vmatprep.subr.bf16.mxu0 0
      %1220 = vmatpush1.bf16.msra.mxu0 0
      %1221 = vmatprep.subr.bf16.mxu0 0
      %1222 = vmatpush1.bf16.msra.mxu0 0
      %1223 = vmatprep.subr.bf16.mxu0 0
      %1224 = vmatpush1.bf16.msra.mxu0 0
      %1225 = vmatprep.subr.bf16.mxu0 0
      %1226 = vmatpush1.bf16.msra.mxu0 0
      %1227 = vmatprep.subr.bf16.mxu0 0
      %1228 = vmatpush1.bf16.msra.mxu0 0
      %1229 = vmatprep.subr.bf16.mxu0 0
      %1230 = vmatpush1.bf16.msra.mxu0 0
      %1231 = vmatprep.subr.bf16.mxu0 0
      %1232 = vmatpush1.bf16.msra.mxu0 0
      %1233 = vmatprep.subr.bf16.mxu0 0
      %1234 = vmatpush1.bf16.msra.mxu0 0
      %1235 = vmatprep.subr.bf16.mxu0 0
      %1236 = vmatpush1.bf16.msra.mxu0 0
      %1237 = vmatprep.subr.bf16.mxu0 0
      %1238 = vmatpush1.bf16.msra.mxu0 0
      %1239 = vmatprep.subr.bf16.mxu0 0
      %1240 = vmatpush1.bf16.msra.mxu0 0
      %1241 = vmatprep.mubr.bf16.mxu0 0
      %1242 = vmatmul.mubr.bf16.gmra.mrb[0].mxu0 %v1207
      %v1243 = vpop.f32.mrb[0].mxu0
      %v1244 = vadd.f32 0.0, %v1243
      %v1245 = vpop.f32.mrb[0].mxu0
      %v1246 = vpop.f32.mrb[0].mxu0
      %v1247 = vadd.f32 0.0, %v1246
      %v1248 = vpop.f32.mrb[0].mxu0
      %1249 = vdwg.mxu0
      %1250 = vrot.lane.b32.xlu0 %v371, 56
      %v1251 = vpop.permute.xlu0 %1250
      %v1254 = vsel %vm576, %v1154, 0
      %1256 = vmatprep.subr.bf16.mxu0 0
      %1257 = vmatpush1.bf16.msra.mxu0 %v1251
      %1258 = vmatprep.subr.bf16.mxu0 0
      %1259 = vmatpush1.bf16.msra.mxu0 0
      %1260 = vmatprep.subr.bf16.mxu0 0
      %1261 = vmatpush1.bf16.msra.mxu0 0
      %1262 = vmatprep.subr.bf16.mxu0 0
      %1263 = vmatpush1.bf16.msra.mxu0 0
      %1264 = vmatprep.subr.bf16.mxu0 0
      %1265 = vmatpush1.bf16.msra.mxu0 0
      %1266 = vmatprep.subr.bf16.mxu0 0
      %1267 = vmatpush1.bf16.msra.mxu0 0
      %1268 = vmatprep.subr.bf16.mxu0 0
      %1269 = vmatpush1.bf16.msra.mxu0 0
      %1270 = vmatprep.subr.bf16.mxu0 0
      %1271 = vmatpush1.bf16.msra.mxu0 0
      %1272 = vmatprep.subr.bf16.mxu0 0
      %1273 = vmatpush1.bf16.msra.mxu0 0
      %1274 = vmatprep.subr.bf16.mxu0 0
      %1275 = vmatpush1.bf16.msra.mxu0 0
      %1276 = vmatprep.subr.bf16.mxu0 0
      %1277 = vmatpush1.bf16.msra.mxu0 0
      %1278 = vmatprep.subr.bf16.mxu0 0
      %1279 = vmatpush1.bf16.msra.mxu0 0
      %1280 = vmatprep.subr.bf16.mxu0 0
      %1281 = vmatpush1.bf16.msra.mxu0 0
      %1282 = vmatprep.subr.bf16.mxu0 0
      %1283 = vmatpush1.bf16.msra.mxu0 0
      %1284 = vmatprep.subr.bf16.mxu0 0
      %1285 = vmatpush1.bf16.msra.mxu0 0
      %1286 = vmatprep.subr.bf16.mxu0 0
      %1287 = vmatpush1.bf16.msra.mxu0 0
      %1288 = vmatprep.mubr.bf16.mxu0 0
      %1289 = vmatmul.mubr.bf16.gmra.mrb[0].mxu0 %v1254
      %v1290 = vpop.f32.mrb[0].mxu0
      %v1291 = vadd.f32 0.0, %v1290
      %v1292 = vpop.f32.mrb[0].mxu0
      %v1293 = vpop.f32.mrb[0].mxu0
      %v1294 = vadd.f32 0.0, %v1293
      %v1295 = vpop.f32.mrb[0].mxu0
      %1296 = vdwg.mxu0
      %1297 = vrot.lane.b32.xlu0 %v372, 56
      %v1298 = vpop.permute.xlu0 %1297
      %v1301 = vsel %vm576, %v1155, 0
      %1303 = vmatprep.subr.bf16.mxu0 0
      %1304 = vmatpush1.bf16.msra.mxu0 %v1298
      %1305 = vmatprep.subr.bf16.mxu0 0
      %1306 = vmatpush1.bf16.msra.mxu0 0
      %1307 = vmatprep.subr.bf16.mxu0 0
      %1308 = vmatpush1.bf16.msra.mxu0 0
      %1309 = vmatprep.subr.bf16.mxu0 0
      %1310 = vmatpush1.bf16.msra.mxu0 0
      %1311 = vmatprep.subr.bf16.mxu0 0
      %1312 = vmatpush1.bf16.msra.mxu0 0
      %1313 = vmatprep.subr.bf16.mxu0 0
      %1314 = vmatpush1.bf16.msra.mxu0 0
      %1315 = vmatprep.subr.bf16.mxu0 0
      %1316 = vmatpush1.bf16.msra.mxu0 0
      %1317 = vmatprep.subr.bf16.mxu0 0
      %1318 = vmatpush1.bf16.msra.mxu0 0
      %1319 = vmatprep.subr.bf16.mxu0 0
      %1320 = vmatpush1.bf16.msra.mxu0 0
      %1321 = vmatprep.subr.bf16.mxu0 0
      %1322 = vmatpush1.bf16.msra.mxu0 0
      %1323 = vmatprep.subr.bf16.mxu0 0
      %1324 = vmatpush1.bf16.msra.mxu0 0
      %1325 = vmatprep.subr.bf16.mxu0 0
      %1326 = vmatpush1.bf16.msra.mxu0 0
      %1327 = vmatprep.subr.bf16.mxu0 0
      %1328 = vmatpush1.bf16.msra.mxu0 0
      %1329 = vmatprep.subr.bf16.mxu0 0
      %1330 = vmatpush1.bf16.msra.mxu0 0
      %1331 = vmatprep.subr.bf16.mxu0 0
      %1332 = vmatpush1.bf16.msra.mxu0 0
      %1333 = vmatprep.subr.bf16.mxu0 0
      %1334 = vmatpush1.bf16.msra.mxu0 0
      %1335 = vmatprep.mubr.bf16.mxu0 0
      %1336 = vmatmul.mubr.bf16.gmra.mrb[0].mxu0 %v1301
      %v1337 = vpop.f32.mrb[0].mxu0
      %v1338 = vadd.f32 0.0, %v1337
      %v1339 = vpop.f32.mrb[0].mxu0
      %v1340 = vpop.f32.mrb[0].mxu0
      %v1341 = vadd.f32 0.0, %v1340
      %v1342 = vpop.f32.mrb[0].mxu0
      %1343 = vdwg.mxu0
      %s1344 = scalar_lea.vmem %s3, 32
      %v1345 = vld [vmem:[%s1344] sm:$0xff]
      %v1346 = vld [vmem:[%s1344 + $0x8] sm:$0xff]
      %1347 = vrot.lane.b32.xlu0 %v369, 112
      %v1348 = vpop.permute.xlu0 %1347
      %1349 = vrot.lane.b32.xlu0 %v369, 80
      %v1350 = vpop.permute.xlu0 %1349
      %v1352 = vsel %vm378, %v1348, 0
      %v1355 = vsel %vm378, %v1350, 0
      %1357 = vmatprep.subr.bf16.mxu0 0
      %1358 = vmatpush1.bf16.xpose.msra.mxu0 %v1355
      %1359 = vmatprep.subr.bf16.mxu0 0
      %1360 = vmatpush1.bf16.xpose.msra.mxu0 0
      %1361 = vmatprep.subr.bf16.mxu0 0
      %1362 = vmatpush1.bf16.xpose.msra.mxu0 0
      %1363 = vmatprep.subr.bf16.mxu0 0
      %1364 = vmatpush1.bf16.xpose.msra.mxu0 0
      %1365 = vmatprep.subr.bf16.mxu0 0
      %1366 = vmatpush1.bf16.xpose.msra.mxu0 0
      %1367 = vmatprep.subr.bf16.mxu0 0
      %1368 = vmatpush1.bf16.xpose.msra.mxu0 0
      %1369 = vmatprep.subr.bf16.mxu0 0
      %1370 = vmatpush1.bf16.xpose.msra.mxu0 0
      %1371 = vmatprep.subr.bf16.mxu0 0
      %1372 = vmatpush1.bf16.xpose.msra.mxu0 0
      %1373 = vmatprep.subr.bf16.mxu0 0
      %1374 = vmatpush1.bf16.xpose.msra.mxu0 0
      %1375 = vmatprep.subr.bf16.mxu0 0
      %1376 = vmatpush1.bf16.xpose.msra.mxu0 0
      %1377 = vmatprep.subr.bf16.mxu0 0
      %1378 = vmatpush1.bf16.xpose.msra.mxu0 0
      %1379 = vmatprep.subr.bf16.mxu0 0
      %1380 = vmatpush1.bf16.xpose.msra.mxu0 0
      %1381 = vmatprep.subr.bf16.mxu0 0
      %1382 = vmatpush1.bf16.xpose.msra.mxu0 0
      %1383 = vmatprep.subr.bf16.mxu0 0
      %1384 = vmatpush1.bf16.xpose.msra.mxu0 0
      %1385 = vmatprep.subr.bf16.mxu0 0
      %1386 = vmatpush1.bf16.xpose.msra.mxu0 0
      %1387 = vmatprep.subr.bf16.mxu0 0
      %1388 = vmatpush1.bf16.xpose.msra.mxu0 0
      %1389 = vmatprep.mubr.bf16.mxu0 0
      %1390 = vmatmul.mubr.bf16.gmra.mrb[0].mxu0 %v1352
      %v1391 = vpop.f32.mrb[0].mxu0
      %v1392 = vadd.f32 %v1345, %v1391
      %v1393 = vpop.f32.mrb[0].mxu0
      %v1394 = vpop.f32.mrb[0].mxu0
      %v1395 = vadd.f32 %v1346, %v1394
      %v1396 = vpop.f32.mrb[0].mxu0
      %1397 = vdwg.mxu0
      %1398 = vrot.lane.b32.xlu0 %v370, 112
      %v1399 = vpop.permute.xlu0 %1398
      %1400 = vrot.lane.b32.xlu0 %v370, 80
      %v1401 = vpop.permute.xlu0 %1400
      %v1403 = vsel %vm378, %v1399, 0
      %v1406 = vsel %vm378, %v1401, 0
      %1408 = vmatprep.subr.bf16.mxu0 0
      %1409 = vmatpush1.bf16.xpose.msra.mxu0 %v1406
      %1410 = vmatprep.subr.bf16.mxu0 0
      %1411 = vmatpush1.bf16.xpose.msra.mxu0 0
      %1412 = vmatprep.subr.bf16.mxu0 0
      %1413 = vmatpush1.bf16.xpose.msra.mxu0 0
      %1414 = vmatprep.subr.bf16.mxu0 0
      %1415 = vmatpush1.bf16.xpose.msra.mxu0 0
      %1416 = vmatprep.subr.bf16.mxu0 0
      %1417 = vmatpush1.bf16.xpose.msra.mxu0 0
      %1418 = vmatprep.subr.bf16.mxu0 0
      %1419 = vmatpush1.bf16.xpose.msra.mxu0 0
      %1420 = vmatprep.subr.bf16.mxu0 0
      %1421 = vmatpush1.bf16.xpose.msra.mxu0 0
      %1422 = vmatprep.subr.bf16.mxu0 0
      %1423 = vmatpush1.bf16.xpose.msra.mxu0 0
      %1424 = vmatprep.subr.bf16.mxu0 0
      %1425 = vmatpush1.bf16.xpose.msra.mxu0 0
      %1426 = vmatprep.subr.bf16.mxu0 0
      %1427 = vmatpush1.bf16.xpose.msra.mxu0 0
      %1428 = vmatprep.subr.bf16.mxu0 0
      %1429 = vmatpush1.bf16.xpose.msra.mxu0 0
      %1430 = vmatprep.subr.bf16.mxu0 0
      %1431 = vmatpush1.bf16.xpose.msra.mxu0 0
      %1432 = vmatprep.subr.bf16.mxu0 0
      %1433 = vmatpush1.bf16.xpose.msra.mxu0 0
      %1434 = vmatprep.subr.bf16.mxu0 0
      %1435 = vmatpush1.bf16.xpose.msra.mxu0 0
      %1436 = vmatprep.subr.bf16.mxu0 0
      %1437 = vmatpush1.bf16.xpose.msra.mxu0 0
      %1438 = vmatprep.subr.bf16.mxu0 0
      %1439 = vmatpush1.bf16.xpose.msra.mxu0 0
      %1440 = vmatprep.mubr.bf16.mxu0 0
      %1441 = vmatmul.mubr.bf16.gmra.mrb[0].mxu0 %v1403
      %v1442 = vpop.f32.mrb[0].mxu0
      %v1443 = vadd.f32 %v1345, %v1442
      %v1444 = vpop.f32.mrb[0].mxu0
      %v1445 = vpop.f32.mrb[0].mxu0
      %v1446 = vadd.f32 %v1346, %v1445
      %v1447 = vpop.f32.mrb[0].mxu0
      %1448 = vdwg.mxu0
      %1449 = vrot.lane.b32.xlu0 %v371, 112
      %v1450 = vpop.permute.xlu0 %1449
      %1451 = vrot.lane.b32.xlu0 %v371, 80
      %v1452 = vpop.permute.xlu0 %1451
      %v1454 = vsel %vm378, %v1450, 0
      %v1457 = vsel %vm378, %v1452, 0
      %1459 = vmatprep.subr.bf16.mxu0 0
      %1460 = vmatpush1.bf16.xpose.msra.mxu0 %v1457
      %1461 = vmatprep.subr.bf16.mxu0 0
      %1462 = vmatpush1.bf16.xpose.msra.mxu0 0
      %1463 = vmatprep.subr.bf16.mxu0 0
      %1464 = vmatpush1.bf16.xpose.msra.mxu0 0
      %1465 = vmatprep.subr.bf16.mxu0 0
      %1466 = vmatpush1.bf16.xpose.msra.mxu0 0
      %1467 = vmatprep.subr.bf16.mxu0 0
      %1468 = vmatpush1.bf16.xpose.msra.mxu0 0
      %1469 = vmatprep.subr.bf16.mxu0 0
      %1470 = vmatpush1.bf16.xpose.msra.mxu0 0
      %1471 = vmatprep.subr.bf16.mxu0 0
      %1472 = vmatpush1.bf16.xpose.msra.mxu0 0
      %1473 = vmatprep.subr.bf16.mxu0 0
      %1474 = vmatpush1.bf16.xpose.msra.mxu0 0
      %1475 = vmatprep.subr.bf16.mxu0 0
      %1476 = vmatpush1.bf16.xpose.msra.mxu0 0
      %1477 = vmatprep.subr.bf16.mxu0 0
      %1478 = vmatpush1.bf16.xpose.msra.mxu0 0
      %1479 = vmatprep.subr.bf16.mxu0 0
      %1480 = vmatpush1.bf16.xpose.msra.mxu0 0
      %1481 = vmatprep.subr.bf16.mxu0 0
      %1482 = vmatpush1.bf16.xpose.msra.mxu0 0
      %1483 = vmatprep.subr.bf16.mxu0 0
      %1484 = vmatpush1.bf16.xpose.msra.mxu0 0
      %1485 = vmatprep.subr.bf16.mxu0 0
      %1486 = vmatpush1.bf16.xpose.msra.mxu0 0
      %1487 = vmatprep.subr.bf16.mxu0 0
      %1488 = vmatpush1.bf16.xpose.msra.mxu0 0
      %1489 = vmatprep.subr.bf16.mxu0 0
      %1490 = vmatpush1.bf16.xpose.msra.mxu0 0
      %1491 = vmatprep.mubr.bf16.mxu0 0
      %1492 = vmatmul.mubr.bf16.gmra.mrb[0].mxu0 %v1454
      %v1493 = vpop.f32.mrb[0].mxu0
      %v1494 = vadd.f32 %v1345, %v1493
      %v1495 = vpop.f32.mrb[0].mxu0
      %v1496 = vpop.f32.mrb[0].mxu0
      %v1497 = vadd.f32 %v1346, %v1496
      %v1498 = vpop.f32.mrb[0].mxu0
      %1499 = vdwg.mxu0
      %1500 = vrot.lane.b32.xlu0 %v372, 112
      %v1501 = vpop.permute.xlu0 %1500
      %1502 = vrot.lane.b32.xlu0 %v372, 80
      %v1503 = vpop.permute.xlu0 %1502
      %v1505 = vsel %vm378, %v1501, 0
      %v1508 = vsel %vm378, %v1503, 0
      %1510 = vmatprep.subr.bf16.mxu0 0
      %1511 = vmatpush1.bf16.xpose.msra.mxu0 %v1508
      %1512 = vmatprep.subr.bf16.mxu0 0
      %1513 = vmatpush1.bf16.xpose.msra.mxu0 0
      %1514 = vmatprep.subr.bf16.mxu0 0
      %1515 = vmatpush1.bf16.xpose.msra.mxu0 0
      %1516 = vmatprep.subr.bf16.mxu0 0
      %1517 = vmatpush1.bf16.xpose.msra.mxu0 0
      %1518 = vmatprep.subr.bf16.mxu0 0
      %1519 = vmatpush1.bf16.xpose.msra.mxu0 0
      %1520 = vmatprep.subr.bf16.mxu0 0
      %1521 = vmatpush1.bf16.xpose.msra.mxu0 0
      %1522 = vmatprep.subr.bf16.mxu0 0
      %1523 = vmatpush1.bf16.xpose.msra.mxu0 0
      %1524 = vmatprep.subr.bf16.mxu0 0
      %1525 = vmatpush1.bf16.xpose.msra.mxu0 0
      %1526 = vmatprep.subr.bf16.mxu0 0
      %1527 = vmatpush1.bf16.xpose.msra.mxu0 0
      %1528 = vmatprep.subr.bf16.mxu0 0
      %1529 = vmatpush1.bf16.xpose.msra.mxu0 0
      %1530 = vmatprep.subr.bf16.mxu0 0
      %1531 = vmatpush1.bf16.xpose.msra.mxu0 0
      %1532 = vmatprep.subr.bf16.mxu0 0
      %1533 = vmatpush1.bf16.xpose.msra.mxu0 0
      %1534 = vmatprep.subr.bf16.mxu0 0
      %1535 = vmatpush1.bf16.xpose.msra.mxu0 0
      %1536 = vmatprep.subr.bf16.mxu0 0
      %1537 = vmatpush1.bf16.xpose.msra.mxu0 0
      %1538 = vmatprep.subr.bf16.mxu0 0
      %1539 = vmatpush1.bf16.xpose.msra.mxu0 0
      %1540 = vmatprep.subr.bf16.mxu0 0
      %1541 = vmatpush1.bf16.xpose.msra.mxu0 0
      %1542 = vmatprep.mubr.bf16.mxu0 0
      %1543 = vmatmul.mubr.bf16.gmra.mrb[0].mxu0 %v1505
      %v1544 = vpop.f32.mrb[0].mxu0
      %v1545 = vadd.f32 %v1345, %v1544
      %v1546 = vpop.f32.mrb[0].mxu0
      %v1547 = vpop.f32.mrb[0].mxu0
      %v1548 = vadd.f32 %v1346, %v1547
      %v1549 = vpop.f32.mrb[0].mxu0
      %1550 = vdwg.mxu0
      %v1551 = vsel %vm576, %v1392, -inf
      %1552 = vmax.xlane.f32.xlu0 %v1551
      %v1553 = vpop.xlane.xlu0 %1552
      %v1554 = vsel %vm576, %v1395, -inf
      %1555 = vmax.xlane.f32.xlu0 %v1554
      %v1556 = vpop.xlane.xlu0 %1555
      %v1557 = vsel %vm576, %v1443, -inf
      %1558 = vmax.xlane.f32.xlu0 %v1557
      %v1559 = vpop.xlane.xlu0 %1558
      %v1560 = vsel %vm576, %v1446, -inf
      %1561 = vmax.xlane.f32.xlu0 %v1560
      %v1562 = vpop.xlane.xlu0 %1561
      %v1563 = vsel %vm576, %v1494, -inf
      %1564 = vmax.xlane.f32.xlu0 %v1563
      %v1565 = vpop.xlane.xlu0 %1564
      %v1566 = vsel %vm576, %v1497, -inf
      %1567 = vmax.xlane.f32.xlu0 %v1566
      %v1568 = vpop.xlane.xlu0 %1567
      %v1569 = vsel %vm576, %v1545, -inf
      %1570 = vmax.xlane.f32.xlu0 %v1569
      %v1571 = vpop.xlane.xlu0 %1570
      %v1572 = vsel %vm576, %v1548, -inf
      %1573 = vmax.xlane.f32.xlu0 %v1572
      %v1574 = vpop.xlane.xlu0 %1573
      %v1575 = vsub.f32 %v1392, %v1553
      %v1576 = vsub.f32 %v1395, %v1556
      %v1577 = vsub.f32 %v1443, %v1559
      %v1578 = vsub.f32 %v1446, %v1562
      %v1579 = vsub.f32 %v1494, %v1565
      %v1580 = vsub.f32 %v1497, %v1568
      %v1581 = vsub.f32 %v1545, %v1571
      %v1582 = vsub.f32 %v1548, %v1574
      %v1583 = vmul.f32 %v1575, 1.442695
      %v1584 = vpow.pop %v1583
      %v1585 = vmul.f32 %v1576, 1.442695
      %v1586 = vpow.pop %v1585
      %v1587 = vmul.f32 %v1577, 1.442695
      %v1588 = vpow.pop %v1587
      %v1589 = vmul.f32 %v1578, 1.442695
      %v1590 = vpow.pop %v1589
      %v1591 = vmul.f32 %v1579, 1.442695
      %v1592 = vpow.pop %v1591
      %v1593 = vmul.f32 %v1580, 1.442695
      %v1594 = vpow.pop %v1593
      %v1595 = vmul.f32 %v1581, 1.442695
      %v1596 = vpow.pop %v1595
      %v1597 = vmul.f32 %v1582, 1.442695
      %v1598 = vpow.pop %v1597
      %v1599 = vsel %vm576, %v1584, 0.0
      %1600 = vadd.xlane.f32.xlu0 %v1599
      %v1601 = vpop.xlane.xlu0 %1600
      %v1602 = vsel %vm576, %v1586, 0.0
      %1603 = vadd.xlane.f32.xlu0 %v1602
      %v1604 = vpop.xlane.xlu0 %1603
      %v1605 = vsel %vm576, %v1588, 0.0
      %1606 = vadd.xlane.f32.xlu0 %v1605
      %v1607 = vpop.xlane.xlu0 %1606
      %v1608 = vsel %vm576, %v1590, 0.0
      %1609 = vadd.xlane.f32.xlu0 %v1608
      %v1610 = vpop.xlane.xlu0 %1609
      %v1611 = vsel %vm576, %v1592, 0.0
      %1612 = vadd.xlane.f32.xlu0 %v1611
      %v1613 = vpop.xlane.xlu0 %1612
      %v1614 = vsel %vm576, %v1594, 0.0
      %1615 = vadd.xlane.f32.xlu0 %v1614
      %v1616 = vpop.xlane.xlu0 %1615
      %v1617 = vsel %vm576, %v1596, 0.0
      %1618 = vadd.xlane.f32.xlu0 %v1617
      %v1619 = vpop.xlane.xlu0 %1618
      %v1620 = vsel %vm576, %v1598, 0.0
      %1621 = vadd.xlane.f32.xlu0 %v1620
      %v1622 = vpop.xlane.xlu0 %1621
      %v1623 = vrcp.pop %v1601
      %v1624 = vrcp.pop %v1604
      %v1625 = vrcp.pop %v1607
      %v1626 = vrcp.pop %v1610
      %v1627 = vrcp.pop %v1613
      %v1628 = vrcp.pop %v1616
      %v1629 = vrcp.pop %v1619
      %v1630 = vrcp.pop %v1622
      %v1631 = vmul.f32 %v1584, %v1623
      %v1632 = vmul.f32 %v1586, %v1624
      %v1633 = vmul.f32 %v1588, %v1625
      %v1634 = vmul.f32 %v1590, %v1626
      %v1635 = vmul.f32 %v1592, %v1627
      %v1636 = vmul.f32 %v1594, %v1628
      %v1637 = vmul.f32 %v1596, %v1629
      %v1638 = vmul.f32 %v1598, %v1630
      %v1639 = vpack.c.bf16 %v1632, %v1631
      %v1640 = vpack.c.bf16 %v1634, %v1633
      %v1641 = vpack.c.bf16 %v1636, %v1635
      %v1642 = vpack.c.bf16 %v1638, %v1637
      %1643 = vrot.lane.b32.xlu0 %v369, 48
      %v1644 = vpop.permute.xlu0 %1643
      %v1647 = vsel %vm576, %v1639, 0
      %1649 = vmatprep.subr.bf16.mxu0 0
      %1650 = vmatpush1.bf16.msra.mxu0 %v1644
      %1651 = vmatprep.subr.bf16.mxu0 0
      %1652 = vmatpush1.bf16.msra.mxu0 0
      %1653 = vmatprep.subr.bf16.mxu0 0
      %1654 = vmatpush1.bf16.msra.mxu0 0
      %1655 = vmatprep.subr.bf16.mxu0 0
      %1656 = vmatpush1.bf16.msra.mxu0 0
      %1657 = vmatprep.subr.bf16.mxu0 0
      %1658 = vmatpush1.bf16.msra.mxu0 0
      %1659 = vmatprep.subr.bf16.mxu0 0
      %1660 = vmatpush1.bf16.msra.mxu0 0
      %1661 = vmatprep.subr.bf16.mxu0 0
      %1662 = vmatpush1.bf16.msra.mxu0 0
      %1663 = vmatprep.subr.bf16.mxu0 0
      %1664 = vmatpush1.bf16.msra.mxu0 0
      %1665 = vmatprep.subr.bf16.mxu0 0
      %1666 = vmatpush1.bf16.msra.mxu0 0
      %1667 = vmatprep.subr.bf16.mxu0 0
      %1668 = vmatpush1.bf16.msra.mxu0 0
      %1669 = vmatprep.subr.bf16.mxu0 0
      %1670 = vmatpush1.bf16.msra.mxu0 0
      %1671 = vmatprep.subr.bf16.mxu0 0
      %1672 = vmatpush1.bf16.msra.mxu0 0
      %1673 = vmatprep.subr.bf16.mxu0 0
      %1674 = vmatpush1.bf16.msra.mxu0 0
      %1675 = vmatprep.subr.bf16.mxu0 0
      %1676 = vmatpush1.bf16.msra.mxu0 0
      %1677 = vmatprep.subr.bf16.mxu0 0
      %1678 = vmatpush1.bf16.msra.mxu0 0
      %1679 = vmatprep.subr.bf16.mxu0 0
      %1680 = vmatpush1.bf16.msra.mxu0 0
      %1681 = vmatprep.mubr.bf16.mxu0 0
      %1682 = vmatmul.mubr.bf16.gmra.mrb[0].mxu0 %v1647
      %v1683 = vpop.f32.mrb[0].mxu0
      %v1684 = vadd.f32 0.0, %v1683
      %v1685 = vpop.f32.mrb[0].mxu0
      %v1686 = vpop.f32.mrb[0].mxu0
      %v1687 = vadd.f32 0.0, %v1686
      %v1688 = vpop.f32.mrb[0].mxu0
      %1689 = vdwg.mxu0
      %1690 = vrot.lane.b32.xlu0 %v370, 48
      %v1691 = vpop.permute.xlu0 %1690
      %v1694 = vsel %vm576, %v1640, 0
      %1696 = vmatprep.subr.bf16.mxu0 0
      %1697 = vmatpush1.bf16.msra.mxu0 %v1691
      %1698 = vmatprep.subr.bf16.mxu0 0
      %1699 = vmatpush1.bf16.msra.mxu0 0
      %1700 = vmatprep.subr.bf16.mxu0 0
      %1701 = vmatpush1.bf16.msra.mxu0 0
      %1702 = vmatprep.subr.bf16.mxu0 0
      %1703 = vmatpush1.bf16.msra.mxu0 0
      %1704 = vmatprep.subr.bf16.mxu0 0
      %1705 = vmatpush1.bf16.msra.mxu0 0
      %1706 = vmatprep.subr.bf16.mxu0 0
      %1707 = vmatpush1.bf16.msra.mxu0 0
      %1708 = vmatprep.subr.bf16.mxu0 0
      %1709 = vmatpush1.bf16.msra.mxu0 0
      %1710 = vmatprep.subr.bf16.mxu0 0
      %1711 = vmatpush1.bf16.msra.mxu0 0
      %1712 = vmatprep.subr.bf16.mxu0 0
      %1713 = vmatpush1.bf16.msra.mxu0 0
      %1714 = vmatprep.subr.bf16.mxu0 0
      %1715 = vmatpush1.bf16.msra.mxu0 0
      %1716 = vmatprep.subr.bf16.mxu0 0
      %1717 = vmatpush1.bf16.msra.mxu0 0
      %1718 = vmatprep.subr.bf16.mxu0 0
      %1719 = vmatpush1.bf16.msra.mxu0 0
      %1720 = vmatprep.subr.bf16.mxu0 0
      %1721 = vmatpush1.bf16.msra.mxu0 0
      %1722 = vmatprep.subr.bf16.mxu0 0
      %1723 = vmatpush1.bf16.msra.mxu0 0
      %1724 = vmatprep.subr.bf16.mxu0 0
      %1725 = vmatpush1.bf16.msra.mxu0 0
      %1726 = vmatprep.subr.bf16.mxu0 0
      %1727 = vmatpush1.bf16.msra.mxu0 0
      %1728 = vmatprep.mubr.bf16.mxu0 0
      %1729 = vmatmul.mubr.bf16.gmra.mrb[0].mxu0 %v1694
      %v1730 = vpop.f32.mrb[0].mxu0
      %v1731 = vadd.f32 0.0, %v1730
      %v1732 = vpop.f32.mrb[0].mxu0
      %v1733 = vpop.f32.mrb[0].mxu0
      %v1734 = vadd.f32 0.0, %v1733
      %v1735 = vpop.f32.mrb[0].mxu0
      %1736 = vdwg.mxu0
      %1737 = vrot.lane.b32.xlu0 %v371, 48
      %v1738 = vpop.permute.xlu0 %1737
      %v1741 = vsel %vm576, %v1641, 0
      %1743 = vmatprep.subr.bf16.mxu0 0
      %1744 = vmatpush1.bf16.msra.mxu0 %v1738
      %1745 = vmatprep.subr.bf16.mxu0 0
      %1746 = vmatpush1.bf16.msra.mxu0 0
      %1747 = vmatprep.subr.bf16.mxu0 0
      %1748 = vmatpush1.bf16.msra.mxu0 0
      %1749 = vmatprep.subr.bf16.mxu0 0
      %1750 = vmatpush1.bf16.msra.mxu0 0
      %1751 = vmatprep.subr.bf16.mxu0 0
      %1752 = vmatpush1.bf16.msra.mxu0 0
      %1753 = vmatprep.subr.bf16.mxu0 0
      %1754 = vmatpush1.bf16.msra.mxu0 0
      %1755 = vmatprep.subr.bf16.mxu0 0
      %1756 = vmatpush1.bf16.msra.mxu0 0
      %1757 = vmatprep.subr.bf16.mxu0 0
      %1758 = vmatpush1.bf16.msra.mxu0 0
      %1759 = vmatprep.subr.bf16.mxu0 0
      %1760 = vmatpush1.bf16.msra.mxu0 0
      %1761 = vmatprep.subr.bf16.mxu0 0
      %1762 = vmatpush1.bf16.msra.mxu0 0
      %1763 = vmatprep.subr.bf16.mxu0 0
      %1764 = vmatpush1.bf16.msra.mxu0 0
      %1765 = vmatprep.subr.bf16.mxu0 0
      %1766 = vmatpush1.bf16.msra.mxu0 0
      %1767 = vmatprep.subr.bf16.mxu0 0
      %1768 = vmatpush1.bf16.msra.mxu0 0
      %1769 = vmatprep.subr.bf16.mxu0 0
      %1770 = vmatpush1.bf16.msra.mxu0 0
      %1771 = vmatprep.subr.bf16.mxu0 0
      %1772 = vmatpush1.bf16.msra.mxu0 0
      %1773 = vmatprep.subr.bf16.mxu0 0
      %1774 = vmatpush1.bf16.msra.mxu0 0
      %1775 = vmatprep.mubr.bf16.mxu0 0
      %1776 = vmatmul.mubr.bf16.gmra.mrb[0].mxu0 %v1741
      %v1777 = vpop.f32.mrb[0].mxu0
      %v1778 = vadd.f32 0.0, %v1777
      %v1779 = vpop.f32.mrb[0].mxu0
      %v1780 = vpop.f32.mrb[0].mxu0
      %v1781 = vadd.f32 0.0, %v1780
      %v1782 = vpop.f32.mrb[0].mxu0
      %1783 = vdwg.mxu0
      %1784 = vrot.lane.b32.xlu0 %v372, 48
      %v1785 = vpop.permute.xlu0 %1784
      %v1788 = vsel %vm576, %v1642, 0
      %1790 = vmatprep.subr.bf16.mxu0 0
      %1791 = vmatpush1.bf16.msra.mxu0 %v1785
      %1792 = vmatprep.subr.bf16.mxu0 0
      %1793 = vmatpush1.bf16.msra.mxu0 0
      %1794 = vmatprep.subr.bf16.mxu0 0
      %1795 = vmatpush1.bf16.msra.mxu0 0
      %1796 = vmatprep.subr.bf16.mxu0 0
      %1797 = vmatpush1.bf16.msra.mxu0 0
      %1798 = vmatprep.subr.bf16.mxu0 0
      %1799 = vmatpush1.bf16.msra.mxu0 0
      %1800 = vmatprep.subr.bf16.mxu0 0
      %1801 = vmatpush1.bf16.msra.mxu0 0
      %1802 = vmatprep.subr.bf16.mxu0 0
      %1803 = vmatpush1.bf16.msra.mxu0 0
      %1804 = vmatprep.subr.bf16.mxu0 0
      %1805 = vmatpush1.bf16.msra.mxu0 0
      %1806 = vmatprep.subr.bf16.mxu0 0
      %1807 = vmatpush1.bf16.msra.mxu0 0
      %1808 = vmatprep.subr.bf16.mxu0 0
      %1809 = vmatpush1.bf16.msra.mxu0 0
      %1810 = vmatprep.subr.bf16.mxu0 0
      %1811 = vmatpush1.bf16.msra.mxu0 0
      %1812 = vmatprep.subr.bf16.mxu0 0
      %1813 = vmatpush1.bf16.msra.mxu0 0
      %1814 = vmatprep.subr.bf16.mxu0 0
      %1815 = vmatpush1.bf16.msra.mxu0 0
      %1816 = vmatprep.subr.bf16.mxu0 0
      %1817 = vmatpush1.bf16.msra.mxu0 0
      %1818 = vmatprep.subr.bf16.mxu0 0
      %1819 = vmatpush1.bf16.msra.mxu0 0
      %1820 = vmatprep.subr.bf16.mxu0 0
      %1821 = vmatpush1.bf16.msra.mxu0 0
      %1822 = vmatprep.mubr.bf16.mxu0 0
      %1823 = vmatmul.mubr.bf16.gmra.mrb[0].mxu0 %v1788
      %v1824 = vpop.f32.mrb[0].mxu0
      %v1825 = vadd.f32 0.0, %v1824
      %v1826 = vpop.f32.mrb[0].mxu0
      %v1827 = vpop.f32.mrb[0].mxu0
      %v1828 = vadd.f32 0.0, %v1827
      %v1829 = vpop.f32.mrb[0].mxu0
      %1830 = vdwg.mxu0
      %s1831 = scalar_lea.vmem %s3, 48
      %v1832 = vld [vmem:[%s1831] sm:$0xff]
      %v1833 = vld [vmem:[%s1831 + $0x8] sm:$0xff]
      %1834 = vrot.lane.b32.xlu0 %v369, 104
      %v1835 = vpop.permute.xlu0 %1834
      %1836 = vrot.lane.b32.xlu0 %v369, 72
      %v1837 = vpop.permute.xlu0 %1836
      %v1839 = vsel %vm378, %v1835, 0
      %v1842 = vsel %vm378, %v1837, 0
      %1844 = vmatprep.subr.bf16.mxu0 0
      %1845 = vmatpush1.bf16.xpose.msra.mxu0 %v1842
      %1846 = vmatprep.subr.bf16.mxu0 0
      %1847 = vmatpush1.bf16.xpose.msra.mxu0 0
      %1848 = vmatprep.subr.bf16.mxu0 0
      %1849 = vmatpush1.bf16.xpose.msra.mxu0 0
      %1850 = vmatprep.subr.bf16.mxu0 0
      %1851 = vmatpush1.bf16.xpose.msra.mxu0 0
      %1852 = vmatprep.subr.bf16.mxu0 0
      %1853 = vmatpush1.bf16.xpose.msra.mxu0 0
      %1854 = vmatprep.subr.bf16.mxu0 0
      %1855 = vmatpush1.bf16.xpose.msra.mxu0 0
      %1856 = vmatprep.subr.bf16.mxu0 0
      %1857 = vmatpush1.bf16.xpose.msra.mxu0 0
      %1858 = vmatprep.subr.bf16.mxu0 0
      %1859 = vmatpush1.bf16.xpose.msra.mxu0 0
      %1860 = vmatprep.subr.bf16.mxu0 0
      %1861 = vmatpush1.bf16.xpose.msra.mxu0 0
      %1862 = vmatprep.subr.bf16.mxu0 0
      %1863 = vmatpush1.bf16.xpose.msra.mxu0 0
      %1864 = vmatprep.subr.bf16.mxu0 0
      %1865 = vmatpush1.bf16.xpose.msra.mxu0 0
      %1866 = vmatprep.subr.bf16.mxu0 0
      %1867 = vmatpush1.bf16.xpose.msra.mxu0 0
      %1868 = vmatprep.subr.bf16.mxu0 0
      %1869 = vmatpush1.bf16.xpose.msra.mxu0 0
      %1870 = vmatprep.subr.bf16.mxu0 0
      %1871 = vmatpush1.bf16.xpose.msra.mxu0 0
      %1872 = vmatprep.subr.bf16.mxu0 0
      %1873 = vmatpush1.bf16.xpose.msra.mxu0 0
      %1874 = vmatprep.subr.bf16.mxu0 0
      %1875 = vmatpush1.bf16.xpose.msra.mxu0 0
      %1876 = vmatprep.mubr.bf16.mxu0 0
      %1877 = vmatmul.mubr.bf16.gmra.mrb[0].mxu0 %v1839
      %v1878 = vpop.f32.mrb[0].mxu0
      %v1879 = vadd.f32 %v1832, %v1878
      %v1880 = vpop.f32.mrb[0].mxu0
      %v1881 = vpop.f32.mrb[0].mxu0
      %v1882 = vadd.f32 %v1833, %v1881
      %v1883 = vpop.f32.mrb[0].mxu0
      %1884 = vdwg.mxu0
      %1885 = vrot.lane.b32.xlu0 %v370, 104
      %v1886 = vpop.permute.xlu0 %1885
      %1887 = vrot.lane.b32.xlu0 %v370, 72
      %v1888 = vpop.permute.xlu0 %1887
      %v1890 = vsel %vm378, %v1886, 0
      %v1893 = vsel %vm378, %v1888, 0
      %1895 = vmatprep.subr.bf16.mxu0 0
      %1896 = vmatpush1.bf16.xpose.msra.mxu0 %v1893
      %1897 = vmatprep.subr.bf16.mxu0 0
      %1898 = vmatpush1.bf16.xpose.msra.mxu0 0
      %1899 = vmatprep.subr.bf16.mxu0 0
      %1900 = vmatpush1.bf16.xpose.msra.mxu0 0
      %1901 = vmatprep.subr.bf16.mxu0 0
      %1902 = vmatpush1.bf16.xpose.msra.mxu0 0
      %1903 = vmatprep.subr.bf16.mxu0 0
      %1904 = vmatpush1.bf16.xpose.msra.mxu0 0
      %1905 = vmatprep.subr.bf16.mxu0 0
      %1906 = vmatpush1.bf16.xpose.msra.mxu0 0
      %1907 = vmatprep.subr.bf16.mxu0 0
      %1908 = vmatpush1.bf16.xpose.msra.mxu0 0
      %1909 = vmatprep.subr.bf16.mxu0 0
      %1910 = vmatpush1.bf16.xpose.msra.mxu0 0
      %1911 = vmatprep.subr.bf16.mxu0 0
      %1912 = vmatpush1.bf16.xpose.msra.mxu0 0
      %1913 = vmatprep.subr.bf16.mxu0 0
      %1914 = vmatpush1.bf16.xpose.msra.mxu0 0
      %1915 = vmatprep.subr.bf16.mxu0 0
      %1916 = vmatpush1.bf16.xpose.msra.mxu0 0
      %1917 = vmatprep.subr.bf16.mxu0 0
      %1918 = vmatpush1.bf16.xpose.msra.mxu0 0
      %1919 = vmatprep.subr.bf16.mxu0 0
      %1920 = vmatpush1.bf16.xpose.msra.mxu0 0
      %1921 = vmatprep.subr.bf16.mxu0 0
      %1922 = vmatpush1.bf16.xpose.msra.mxu0 0
      %1923 = vmatprep.subr.bf16.mxu0 0
      %1924 = vmatpush1.bf16.xpose.msra.mxu0 0
      %1925 = vmatprep.subr.bf16.mxu0 0
      %1926 = vmatpush1.bf16.xpose.msra.mxu0 0
      %1927 = vmatprep.mubr.bf16.mxu0 0
      %1928 = vmatmul.mubr.bf16.gmra.mrb[0].mxu0 %v1890
      %v1929 = vpop.f32.mrb[0].mxu0
      %v1930 = vadd.f32 %v1832, %v1929
      %v1931 = vpop.f32.mrb[0].mxu0
      %v1932 = vpop.f32.mrb[0].mxu0
      %v1933 = vadd.f32 %v1833, %v1932
      %v1934 = vpop.f32.mrb[0].mxu0
      %1935 = vdwg.mxu0
      %1936 = vrot.lane.b32.xlu0 %v371, 104
      %v1937 = vpop.permute.xlu0 %1936
      %1938 = vrot.lane.b32.xlu0 %v371, 72
      %v1939 = vpop.permute.xlu0 %1938
      %v1941 = vsel %vm378, %v1937, 0
      %v1944 = vsel %vm378, %v1939, 0
      %1946 = vmatprep.subr.bf16.mxu0 0
      %1947 = vmatpush1.bf16.xpose.msra.mxu0 %v1944
      %1948 = vmatprep.subr.bf16.mxu0 0
      %1949 = vmatpush1.bf16.xpose.msra.mxu0 0
      %1950 = vmatprep.subr.bf16.mxu0 0
      %1951 = vmatpush1.bf16.xpose.msra.mxu0 0
      %1952 = vmatprep.subr.bf16.mxu0 0
      %1953 = vmatpush1.bf16.xpose.msra.mxu0 0
      %1954 = vmatprep.subr.bf16.mxu0 0
      %1955 = vmatpush1.bf16.xpose.msra.mxu0 0
      %1956 = vmatprep.subr.bf16.mxu0 0
      %1957 = vmatpush1.bf16.xpose.msra.mxu0 0
      %1958 = vmatprep.subr.bf16.mxu0 0
      %1959 = vmatpush1.bf16.xpose.msra.mxu0 0
      %1960 = vmatprep.subr.bf16.mxu0 0
      %1961 = vmatpush1.bf16.xpose.msra.mxu0 0
      %1962 = vmatprep.subr.bf16.mxu0 0
      %1963 = vmatpush1.bf16.xpose.msra.mxu0 0
      %1964 = vmatprep.subr.bf16.mxu0 0
      %1965 = vmatpush1.bf16.xpose.msra.mxu0 0
      %1966 = vmatprep.subr.bf16.mxu0 0
      %1967 = vmatpush1.bf16.xpose.msra.mxu0 0
      %1968 = vmatprep.subr.bf16.mxu0 0
      %1969 = vmatpush1.bf16.xpose.msra.mxu0 0
      %1970 = vmatprep.subr.bf16.mxu0 0
      %1971 = vmatpush1.bf16.xpose.msra.mxu0 0
      %1972 = vmatprep.subr.bf16.mxu0 0
      %1973 = vmatpush1.bf16.xpose.msra.mxu0 0
      %1974 = vmatprep.subr.bf16.mxu0 0
      %1975 = vmatpush1.bf16.xpose.msra.mxu0 0
      %1976 = vmatprep.subr.bf16.mxu0 0
      %1977 = vmatpush1.bf16.xpose.msra.mxu0 0
      %1978 = vmatprep.mubr.bf16.mxu0 0
      %1979 = vmatmul.mubr.bf16.gmra.mrb[0].mxu0 %v1941
      %v1980 = vpop.f32.mrb[0].mxu0
      %v1981 = vadd.f32 %v1832, %v1980
      %v1982 = vpop.f32.mrb[0].mxu0
      %v1983 = vpop.f32.mrb[0].mxu0
      %v1984 = vadd.f32 %v1833, %v1983
      %v1985 = vpop.f32.mrb[0].mxu0
      %1986 = vdwg.mxu0
      %1987 = vrot.lane.b32.xlu0 %v372, 104
      %v1988 = vpop.permute.xlu0 %1987
      %1989 = vrot.lane.b32.xlu0 %v372, 72
      %v1990 = vpop.permute.xlu0 %1989
      %v1992 = vsel %vm378, %v1988, 0
      %v1995 = vsel %vm378, %v1990, 0
      %1997 = vmatprep.subr.bf16.mxu0 0
      %1998 = vmatpush1.bf16.xpose.msra.mxu0 %v1995
      %1999 = vmatprep.subr.bf16.mxu0 0
      %2000 = vmatpush1.bf16.xpose.msra.mxu0 0
      %2001 = vmatprep.subr.bf16.mxu0 0
      %2002 = vmatpush1.bf16.xpose.msra.mxu0 0
      %2003 = vmatprep.subr.bf16.mxu0 0
      %2004 = vmatpush1.bf16.xpose.msra.mxu0 0
      %2005 = vmatprep.subr.bf16.mxu0 0
      %2006 = vmatpush1.bf16.xpose.msra.mxu0 0
      %2007 = vmatprep.subr.bf16.mxu0 0
      %2008 = vmatpush1.bf16.xpose.msra.mxu0 0
      %2009 = vmatprep.subr.bf16.mxu0 0
      %2010 = vmatpush1.bf16.xpose.msra.mxu0 0
      %2011 = vmatprep.subr.bf16.mxu0 0
      %2012 = vmatpush1.bf16.xpose.msra.mxu0 0
      %2013 = vmatprep.subr.bf16.mxu0 0
      %2014 = vmatpush1.bf16.xpose.msra.mxu0 0
      %2015 = vmatprep.subr.bf16.mxu0 0
      %2016 = vmatpush1.bf16.xpose.msra.mxu0 0
      %2017 = vmatprep.subr.bf16.mxu0 0
      %2018 = vmatpush1.bf16.xpose.msra.mxu0 0
      %2019 = vmatprep.subr.bf16.mxu0 0
      %2020 = vmatpush1.bf16.xpose.msra.mxu0 0
      %2021 = vmatprep.subr.bf16.mxu0 0
      %2022 = vmatpush1.bf16.xpose.msra.mxu0 0
      %2023 = vmatprep.subr.bf16.mxu0 0
      %2024 = vmatpush1.bf16.xpose.msra.mxu0 0
      %2025 = vmatprep.subr.bf16.mxu0 0
      %2026 = vmatpush1.bf16.xpose.msra.mxu0 0
      %2027 = vmatprep.subr.bf16.mxu0 0
      %2028 = vmatpush1.bf16.xpose.msra.mxu0 0
      %2029 = vmatprep.mubr.bf16.mxu0 0
      %2030 = vmatmul.mubr.bf16.gmra.mrb[0].mxu0 %v1992
      %v2031 = vpop.f32.mrb[0].mxu0
      %v2032 = vadd.f32 %v1832, %v2031
      %v2033 = vpop.f32.mrb[0].mxu0
      %v2034 = vpop.f32.mrb[0].mxu0
      %v2035 = vadd.f32 %v1833, %v2034
      %v2036 = vpop.f32.mrb[0].mxu0
      %2037 = vdwg.mxu0
      %v2038 = vsel %vm576, %v1879, -inf
      %2039 = vmax.xlane.f32.xlu0 %v2038
      %v2040 = vpop.xlane.xlu0 %2039
      %v2041 = vsel %vm576, %v1882, -inf
      %2042 = vmax.xlane.f32.xlu0 %v2041
      %v2043 = vpop.xlane.xlu0 %2042
      %v2044 = vsel %vm576, %v1930, -inf
      %2045 = vmax.xlane.f32.xlu0 %v2044
      %v2046 = vpop.xlane.xlu0 %2045
      %v2047 = vsel %vm576, %v1933, -inf
      %2048 = vmax.xlane.f32.xlu0 %v2047
      %v2049 = vpop.xlane.xlu0 %2048
      %v2050 = vsel %vm576, %v1981, -inf
      %2051 = vmax.xlane.f32.xlu0 %v2050
      %v2052 = vpop.xlane.xlu0 %2051
      %v2053 = vsel %vm576, %v1984, -inf
      %2054 = vmax.xlane.f32.xlu0 %v2053
      %v2055 = vpop.xlane.xlu0 %2054
      %v2056 = vsel %vm576, %v2032, -inf
      %2057 = vmax.xlane.f32.xlu0 %v2056
      %v2058 = vpop.xlane.xlu0 %2057
      %v2059 = vsel %vm576, %v2035, -inf
      %2060 = vmax.xlane.f32.xlu0 %v2059
      %v2061 = vpop.xlane.xlu0 %2060
      %v2062 = vsub.f32 %v1879, %v2040
      %v2063 = vsub.f32 %v1882, %v2043
      %v2064 = vsub.f32 %v1930, %v2046
      %v2065 = vsub.f32 %v1933, %v2049
      %v2066 = vsub.f32 %v1981, %v2052
      %v2067 = vsub.f32 %v1984, %v2055
      %v2068 = vsub.f32 %v2032, %v2058
      %v2069 = vsub.f32 %v2035, %v2061
      %v2070 = vmul.f32 %v2062, 1.442695
      %v2071 = vpow.pop %v2070
      %v2072 = vmul.f32 %v2063, 1.442695
      %v2073 = vpow.pop %v2072
      %v2074 = vmul.f32 %v2064, 1.442695
      %v2075 = vpow.pop %v2074
      %v2076 = vmul.f32 %v2065, 1.442695
      %v2077 = vpow.pop %v2076
      %v2078 = vmul.f32 %v2066, 1.442695
      %v2079 = vpow.pop %v2078
      %v2080 = vmul.f32 %v2067, 1.442695
      %v2081 = vpow.pop %v2080
      %v2082 = vmul.f32 %v2068, 1.442695
      %v2083 = vpow.pop %v2082
      %v2084 = vmul.f32 %v2069, 1.442695
      %v2085 = vpow.pop %v2084
      %v2086 = vsel %vm576, %v2071, 0.0
      %2087 = vadd.xlane.f32.xlu0 %v2086
      %v2088 = vpop.xlane.xlu0 %2087
      %v2089 = vsel %vm576, %v2073, 0.0
      %2090 = vadd.xlane.f32.xlu0 %v2089
      %v2091 = vpop.xlane.xlu0 %2090
      %v2092 = vsel %vm576, %v2075, 0.0
      %2093 = vadd.xlane.f32.xlu0 %v2092
      %v2094 = vpop.xlane.xlu0 %2093
      %v2095 = vsel %vm576, %v2077, 0.0
      %2096 = vadd.xlane.f32.xlu0 %v2095
      %v2097 = vpop.xlane.xlu0 %2096
      %v2098 = vsel %vm576, %v2079, 0.0
      %2099 = vadd.xlane.f32.xlu0 %v2098
      %v2100 = vpop.xlane.xlu0 %2099
      %v2101 = vsel %vm576, %v2081, 0.0
      %2102 = vadd.xlane.f32.xlu0 %v2101
      %v2103 = vpop.xlane.xlu0 %2102
      %v2104 = vsel %vm576, %v2083, 0.0
      %2105 = vadd.xlane.f32.xlu0 %v2104
      %v2106 = vpop.xlane.xlu0 %2105
      %v2107 = vsel %vm576, %v2085, 0.0
      %2108 = vadd.xlane.f32.xlu0 %v2107
      %v2109 = vpop.xlane.xlu0 %2108
      %v2110 = vrcp.pop %v2088
      %v2111 = vrcp.pop %v2091
      %v2112 = vrcp.pop %v2094
      %v2113 = vrcp.pop %v2097
      %v2114 = vrcp.pop %v2100
      %v2115 = vrcp.pop %v2103
      %v2116 = vrcp.pop %v2106
      %v2117 = vrcp.pop %v2109
      %v2118 = vmul.f32 %v2071, %v2110
      %v2119 = vmul.f32 %v2073, %v2111
      %v2120 = vmul.f32 %v2075, %v2112
      %v2121 = vmul.f32 %v2077, %v2113
      %v2122 = vmul.f32 %v2079, %v2114
      %v2123 = vmul.f32 %v2081, %v2115
      %v2124 = vmul.f32 %v2083, %v2116
      %v2125 = vmul.f32 %v2085, %v2117
      %v2126 = vpack.c.bf16 %v2119, %v2118
      %v2127 = vpack.c.bf16 %v2121, %v2120
      %v2128 = vpack.c.bf16 %v2123, %v2122
      %v2129 = vpack.c.bf16 %v2125, %v2124
      %2130 = vrot.lane.b32.xlu0 %v369, 40
      %v2131 = vpop.permute.xlu0 %2130
      %v2134 = vsel %vm576, %v2126, 0
      %2136 = vmatprep.subr.bf16.mxu0 0
      %2137 = vmatpush1.bf16.msra.mxu0 %v2131
      %2138 = vmatprep.subr.bf16.mxu0 0
      %2139 = vmatpush1.bf16.msra.mxu0 0
      %2140 = vmatprep.subr.bf16.mxu0 0
      %2141 = vmatpush1.bf16.msra.mxu0 0
      %2142 = vmatprep.subr.bf16.mxu0 0
      %2143 = vmatpush1.bf16.msra.mxu0 0
      %2144 = vmatprep.subr.bf16.mxu0 0
      %2145 = vmatpush1.bf16.msra.mxu0 0
      %2146 = vmatprep.subr.bf16.mxu0 0
      %2147 = vmatpush1.bf16.msra.mxu0 0
      %2148 = vmatprep.subr.bf16.mxu0 0
      %2149 = vmatpush1.bf16.msra.mxu0 0
      %2150 = vmatprep.subr.bf16.mxu0 0
      %2151 = vmatpush1.bf16.msra.mxu0 0
      %2152 = vmatprep.subr.bf16.mxu0 0
      %2153 = vmatpush1.bf16.msra.mxu0 0
      %2154 = vmatprep.subr.bf16.mxu0 0
      %2155 = vmatpush1.bf16.msra.mxu0 0
      %2156 = vmatprep.subr.bf16.mxu0 0
      %2157 = vmatpush1.bf16.msra.mxu0 0
      %2158 = vmatprep.subr.bf16.mxu0 0
      %2159 = vmatpush1.bf16.msra.mxu0 0
      %2160 = vmatprep.subr.bf16.mxu0 0
      %2161 = vmatpush1.bf16.msra.mxu0 0
      %2162 = vmatprep.subr.bf16.mxu0 0
      %2163 = vmatpush1.bf16.msra.mxu0 0
      %2164 = vmatprep.subr.bf16.mxu0 0
      %2165 = vmatpush1.bf16.msra.mxu0 0
      %2166 = vmatprep.subr.bf16.mxu0 0
      %2167 = vmatpush1.bf16.msra.mxu0 0
      %2168 = vmatprep.mubr.bf16.mxu0 0
      %2169 = vmatmul.mubr.bf16.gmra.mrb[0].mxu0 %v2134
      %v2170 = vpop.f32.mrb[0].mxu0
      %v2171 = vadd.f32 0.0, %v2170
      %v2172 = vpop.f32.mrb[0].mxu0
      %v2173 = vpop.f32.mrb[0].mxu0
      %v2174 = vadd.f32 0.0, %v2173
      %v2175 = vpop.f32.mrb[0].mxu0
      %2176 = vdwg.mxu0
      %2177 = vrot.lane.b32.xlu0 %v370, 40
      %v2178 = vpop.permute.xlu0 %2177
      %v2181 = vsel %vm576, %v2127, 0
      %2183 = vmatprep.subr.bf16.mxu0 0
      %2184 = vmatpush1.bf16.msra.mxu0 %v2178
      %2185 = vmatprep.subr.bf16.mxu0 0
      %2186 = vmatpush1.bf16.msra.mxu0 0
      %2187 = vmatprep.subr.bf16.mxu0 0
      %2188 = vmatpush1.bf16.msra.mxu0 0
      %2189 = vmatprep.subr.bf16.mxu0 0
      %2190 = vmatpush1.bf16.msra.mxu0 0
      %2191 = vmatprep.subr.bf16.mxu0 0
      %2192 = vmatpush1.bf16.msra.mxu0 0
      %2193 = vmatprep.subr.bf16.mxu0 0
      %2194 = vmatpush1.bf16.msra.mxu0 0
      %2195 = vmatprep.subr.bf16.mxu0 0
      %2196 = vmatpush1.bf16.msra.mxu0 0
      %2197 = vmatprep.subr.bf16.mxu0 0
      %2198 = vmatpush1.bf16.msra.mxu0 0
      %2199 = vmatprep.subr.bf16.mxu0 0
      %2200 = vmatpush1.bf16.msra.mxu0 0
      %2201 = vmatprep.subr.bf16.mxu0 0
      %2202 = vmatpush1.bf16.msra.mxu0 0
      %2203 = vmatprep.subr.bf16.mxu0 0
      %2204 = vmatpush1.bf16.msra.mxu0 0
      %2205 = vmatprep.subr.bf16.mxu0 0
      %2206 = vmatpush1.bf16.msra.mxu0 0
      %2207 = vmatprep.subr.bf16.mxu0 0
      %2208 = vmatpush1.bf16.msra.mxu0 0
      %2209 = vmatprep.subr.bf16.mxu0 0
      %2210 = vmatpush1.bf16.msra.mxu0 0
      %2211 = vmatprep.subr.bf16.mxu0 0
      %2212 = vmatpush1.bf16.msra.mxu0 0
      %2213 = vmatprep.subr.bf16.mxu0 0
      %2214 = vmatpush1.bf16.msra.mxu0 0
      %2215 = vmatprep.mubr.bf16.mxu0 0
      %2216 = vmatmul.mubr.bf16.gmra.mrb[0].mxu0 %v2181
      %v2217 = vpop.f32.mrb[0].mxu0
      %v2218 = vadd.f32 0.0, %v2217
      %v2219 = vpop.f32.mrb[0].mxu0
      %v2220 = vpop.f32.mrb[0].mxu0
      %v2221 = vadd.f32 0.0, %v2220
      %v2222 = vpop.f32.mrb[0].mxu0
      %2223 = vdwg.mxu0
      %2224 = vrot.lane.b32.xlu0 %v371, 40
      %v2225 = vpop.permute.xlu0 %2224
      %v2228 = vsel %vm576, %v2128, 0
      %2230 = vmatprep.subr.bf16.mxu0 0
      %2231 = vmatpush1.bf16.msra.mxu0 %v2225
      %2232 = vmatprep.subr.bf16.mxu0 0
      %2233 = vmatpush1.bf16.msra.mxu0 0
      %2234 = vmatprep.subr.bf16.mxu0 0
      %2235 = vmatpush1.bf16.msra.mxu0 0
      %2236 = vmatprep.subr.bf16.mxu0 0
      %2237 = vmatpush1.bf16.msra.mxu0 0
      %2238 = vmatprep.subr.bf16.mxu0 0
      %2239 = vmatpush1.bf16.msra.mxu0 0
      %2240 = vmatprep.subr.bf16.mxu0 0
      %2241 = vmatpush1.bf16.msra.mxu0 0
      %2242 = vmatprep.subr.bf16.mxu0 0
      %2243 = vmatpush1.bf16.msra.mxu0 0
      %2244 = vmatprep.subr.bf16.mxu0 0
      %2245 = vmatpush1.bf16.msra.mxu0 0
      %2246 = vmatprep.subr.bf16.mxu0 0
      %2247 = vmatpush1.bf16.msra.mxu0 0
      %2248 = vmatprep.subr.bf16.mxu0 0
      %2249 = vmatpush1.bf16.msra.mxu0 0
      %2250 = vmatprep.subr.bf16.mxu0 0
      %2251 = vmatpush1.bf16.msra.mxu0 0
      %2252 = vmatprep.subr.bf16.mxu0 0
      %2253 = vmatpush1.bf16.msra.mxu0 0
      %2254 = vmatprep.subr.bf16.mxu0 0
      %2255 = vmatpush1.bf16.msra.mxu0 0
      %2256 = vmatprep.subr.bf16.mxu0 0
      %2257 = vmatpush1.bf16.msra.mxu0 0
      %2258 = vmatprep.subr.bf16.mxu0 0
      %2259 = vmatpush1.bf16.msra.mxu0 0
      %2260 = vmatprep.subr.bf16.mxu0 0
      %2261 = vmatpush1.bf16.msra.mxu0 0
      %2262 = vmatprep.mubr.bf16.mxu0 0
      %2263 = vmatmul.mubr.bf16.gmra.mrb[0].mxu0 %v2228
      %v2264 = vpop.f32.mrb[0].mxu0
      %v2265 = vadd.f32 0.0, %v2264
      %v2266 = vpop.f32.mrb[0].mxu0
      %v2267 = vpop.f32.mrb[0].mxu0
      %v2268 = vadd.f32 0.0, %v2267
      %v2269 = vpop.f32.mrb[0].mxu0
      %2270 = vdwg.mxu0
      %2271 = vrot.lane.b32.xlu0 %v372, 40
      %v2272 = vpop.permute.xlu0 %2271
      %v2275 = vsel %vm576, %v2129, 0
      %2277 = vmatprep.subr.bf16.mxu0 0
      %2278 = vmatpush1.bf16.msra.mxu0 %v2272
      %2279 = vmatprep.subr.bf16.mxu0 0
      %2280 = vmatpush1.bf16.msra.mxu0 0
      %2281 = vmatprep.subr.bf16.mxu0 0
      %2282 = vmatpush1.bf16.msra.mxu0 0
      %2283 = vmatprep.subr.bf16.mxu0 0
      %2284 = vmatpush1.bf16.msra.mxu0 0
      %2285 = vmatprep.subr.bf16.mxu0 0
      %2286 = vmatpush1.bf16.msra.mxu0 0
      %2287 = vmatprep.subr.bf16.mxu0 0
      %2288 = vmatpush1.bf16.msra.mxu0 0
      %2289 = vmatprep.subr.bf16.mxu0 0
      %2290 = vmatpush1.bf16.msra.mxu0 0
      %2291 = vmatprep.subr.bf16.mxu0 0
      %2292 = vmatpush1.bf16.msra.mxu0 0
      %2293 = vmatprep.subr.bf16.mxu0 0
      %2294 = vmatpush1.bf16.msra.mxu0 0
      %2295 = vmatprep.subr.bf16.mxu0 0
      %2296 = vmatpush1.bf16.msra.mxu0 0
      %2297 = vmatprep.subr.bf16.mxu0 0
      %2298 = vmatpush1.bf16.msra.mxu0 0
      %2299 = vmatprep.subr.bf16.mxu0 0
      %2300 = vmatpush1.bf16.msra.mxu0 0
      %2301 = vmatprep.subr.bf16.mxu0 0
      %2302 = vmatpush1.bf16.msra.mxu0 0
      %2303 = vmatprep.subr.bf16.mxu0 0
      %2304 = vmatpush1.bf16.msra.mxu0 0
      %2305 = vmatprep.subr.bf16.mxu0 0
      %2306 = vmatpush1.bf16.msra.mxu0 0
      %2307 = vmatprep.subr.bf16.mxu0 0
      %2308 = vmatpush1.bf16.msra.mxu0 0
      %2309 = vmatprep.mubr.bf16.mxu0 0
      %2310 = vmatmul.mubr.bf16.gmra.mrb[0].mxu0 %v2275
      %v2311 = vpop.f32.mrb[0].mxu0
      %v2312 = vadd.f32 0.0, %v2311
      %v2313 = vpop.f32.mrb[0].mxu0
      %v2314 = vpop.f32.mrb[0].mxu0
      %v2315 = vadd.f32 0.0, %v2314
      %v2316 = vpop.f32.mrb[0].mxu0
      %2317 = vdwg.mxu0
      %2326 = vrot.lane.b32.xlu0 %v1197, 8
      %v2327 = vpop.permute.xlu0 %2326
      %2328 = vrot.lane.b32.xlu0 %v1200, 8
      %v2329 = vpop.permute.xlu0 %2328
      %2330 = vrot.lane.b32.xlu0 %v1244, 8
      %v2331 = vpop.permute.xlu0 %2330
      %2332 = vrot.lane.b32.xlu0 %v1247, 8
      %v2333 = vpop.permute.xlu0 %2332
      %2334 = vrot.lane.b32.xlu0 %v1291, 8
      %v2335 = vpop.permute.xlu0 %2334
      %2336 = vrot.lane.b32.xlu0 %v1294, 8
      %v2337 = vpop.permute.xlu0 %2336
      %2338 = vrot.lane.b32.xlu0 %v1338, 8
      %v2339 = vpop.permute.xlu0 %2338
      %2340 = vrot.lane.b32.xlu0 %v1341, 8
      %v2341 = vpop.permute.xlu0 %2340
      %2358 = vrot.lane.b32.xlu0 %v1684, 16
      %v2359 = vpop.permute.xlu0 %2358
      %2360 = vrot.lane.b32.xlu0 %v1687, 16
      %v2361 = vpop.permute.xlu0 %2360
      %2362 = vrot.lane.b32.xlu0 %v1731, 16
      %v2363 = vpop.permute.xlu0 %2362
      %2364 = vrot.lane.b32.xlu0 %v1734, 16
      %v2365 = vpop.permute.xlu0 %2364
      %2366 = vrot.lane.b32.xlu0 %v1778, 16
      %v2367 = vpop.permute.xlu0 %2366
      %2368 = vrot.lane.b32.xlu0 %v1781, 16
      %v2369 = vpop.permute.xlu0 %2368
      %2370 = vrot.lane.b32.xlu0 %v1825, 16
      %v2371 = vpop.permute.xlu0 %2370
      %2372 = vrot.lane.b32.xlu0 %v1828, 16
      %v2373 = vpop.permute.xlu0 %2372
      %2390 = vrot.lane.b32.xlu0 %v2171, 24
      %v2391 = vpop.permute.xlu0 %2390
      %2392 = vrot.lane.b32.xlu0 %v2174, 24
      %v2393 = vpop.permute.xlu0 %2392
      %2394 = vrot.lane.b32.xlu0 %v2218, 24
      %v2395 = vpop.permute.xlu0 %2394
      %2396 = vrot.lane.b32.xlu0 %v2221, 24
      %v2397 = vpop.permute.xlu0 %2396
      %2398 = vrot.lane.b32.xlu0 %v2265, 24
      %v2399 = vpop.permute.xlu0 %2398
      %2400 = vrot.lane.b32.xlu0 %v2268, 24
      %v2401 = vpop.permute.xlu0 %2400
      %2402 = vrot.lane.b32.xlu0 %v2312, 24
      %v2403 = vpop.permute.xlu0 %2402
      %2404 = vrot.lane.b32.xlu0 %v2315, 24
      %v2405 = vpop.permute.xlu0 %2404
      %v2414 = vsel %vm378, %v710, %v2327
      %v2415 = vsel %vm378, %v713, %v2329
      %v2416 = vsel %vm378, %v757, %v2331
      %v2417 = vsel %vm378, %v760, %v2333
      %v2418 = vsel %vm378, %v804, %v2335
      %v2419 = vsel %vm378, %v807, %v2337
      %v2420 = vsel %vm378, %v851, %v2339
      %v2421 = vsel %vm378, %v854, %v2341
      %v2422 = vsel %vm576, %v2414, %v2359
      %v2423 = vsel %vm576, %v2415, %v2361
      %v2424 = vsel %vm576, %v2416, %v2363
      %v2425 = vsel %vm576, %v2417, %v2365
      %v2426 = vsel %vm576, %v2418, %v2367
      %v2427 = vsel %vm576, %v2419, %v2369
      %v2428 = vsel %vm576, %v2420, %v2371
      %v2429 = vsel %vm576, %v2421, %v2373
      %vm2430 = vcmask 195584
      %v2431 = vsel %vm2430, %v2422, %v2391
      %v2432 = vsel %vm2430, %v2423, %v2393
      %v2433 = vsel %vm2430, %v2424, %v2395
      %v2434 = vsel %vm2430, %v2425, %v2397
      %v2435 = vsel %vm2430, %v2426, %v2399
      %v2436 = vsel %vm2430, %v2427, %v2401
      %v2437 = vsel %vm2430, %v2428, %v2403
      %v2438 = vsel %vm2430, %v2429, %v2405
      %v2439 = vpack.c.bf16 %v2432, %v2431
      %v2440 = vpack.c.bf16 %v2434, %v2433
      %v2441 = vpack.c.bf16 %v2436, %v2435
      %v2442 = vpack.c.bf16 %v2438, %v2437
      %v2443 = vld [vmem:[%s4] sm:$0xf]
      %v2444 = vld [vmem:[%s4 + $0x4] sm:$0xf]
      %v2445 = vld [vmem:[%s4 + $0x8] sm:$0xf]
      %v2446 = vld [vmem:[%s4 + $0xc] sm:$0xf]
      %v2447 = vld [vmem:[%s5] sm:$0x1]
      %v2449 = vlaneseq
      %v2450 = vshrl.u32 %v2449, 7
      %v2451 = vsub.s32 0, %v2450
      %v2452 = vrot.slane %v2447, %v2451
      %v2458 = vunpack.c.l.b16 %v2443
      %v2459 = vunpack.c.l.b16 %v2444
      %v2460 = vunpack.c.l.b16 %v2445
      %v2461 = vunpack.c.l.b16 %v2446
      %v2462 = vpack.c.b16 %v2459, %v2458
      %v2463 = vpack.c.b16 %v2461, %v2460
      %v2467 = vsel %vm291, %v2439, 0
      %v2470 = vsel %vm291, %v2440, 0
      %v2473 = vsel %vm291, %v2441, 0
      %v2476 = vsel %vm291, %v2442, 0
      %2478 = vmatprep.subr.bf16.mxu0 0
      %2479 = vmatpush1.bf16.msra.mxu0 %v2462
      %2480 = vmatprep.subr.bf16.mxu0 0
      %2481 = vmatpush1.bf16.msra.mxu0 %v2463
      %2482 = vmatprep.subr.bf16.mxu0 0
      %2483 = vmatpush1.bf16.msra.mxu0 0
      %2484 = vmatprep.subr.bf16.mxu0 0
      %2485 = vmatpush1.bf16.msra.mxu0 0
      %2486 = vmatprep.subr.bf16.mxu0 0
      %2487 = vmatpush1.bf16.msra.mxu0 0
      %2488 = vmatprep.subr.bf16.mxu0 0
      %2489 = vmatpush1.bf16.msra.mxu0 0
      %2490 = vmatprep.subr.bf16.mxu0 0
      %2491 = vmatpush1.bf16.msra.mxu0 0
      %2492 = vmatprep.subr.bf16.mxu0 0
      %2493 = vmatpush1.bf16.msra.mxu0 0
      %2494 = vmatprep.subr.bf16.mxu0 0
      %2495 = vmatpush1.bf16.msra.mxu0 0
      %2496 = vmatprep.subr.bf16.mxu0 0
      %2497 = vmatpush1.bf16.msra.mxu0 0
      %2498 = vmatprep.subr.bf16.mxu0 0
      %2499 = vmatpush1.bf16.msra.mxu0 0
      %2500 = vmatprep.subr.bf16.mxu0 0
      %2501 = vmatpush1.bf16.msra.mxu0 0
      %2502 = vmatprep.subr.bf16.mxu0 0
      %2503 = vmatpush1.bf16.msra.mxu0 0
      %2504 = vmatprep.subr.bf16.mxu0 0
      %2505 = vmatpush1.bf16.msra.mxu0 0
      %2506 = vmatprep.subr.bf16.mxu0 0
      %2507 = vmatpush1.bf16.msra.mxu0 0
      %2508 = vmatprep.subr.bf16.mxu0 0
      %2509 = vmatpush1.bf16.msra.mxu0 0
      %2510 = vmatprep.mubr.bf16.mxu0 0
      %2511 = vmatmul.mubr.bf16.gmra.mrb[0].mxu0 %v2467
      %v2512 = vpop.f32.mrb[0].mxu0
      %v2513 = vadd.f32 %v2452, %v2512
      %v2514 = vpop.f32.mrb[0].mxu0
      %v2515 = vpop.f32.mrb[0].mxu0
      %v2516 = vadd.f32 %v2452, %v2515
      %v2517 = vpop.f32.mrb[0].mxu0
      %2518 = vmatprep.mubr.bf16.mxu0 0
      %2519 = vmatmul.mubr.bf16.gmra.mrb[0].mxu0 %v2470
      %v2520 = vpop.f32.mrb[0].mxu0
      %v2521 = vadd.f32 %v2452, %v2520
      %v2522 = vpop.f32.mrb[0].mxu0
      %v2523 = vpop.f32.mrb[0].mxu0
      %v2524 = vadd.f32 %v2452, %v2523
      %v2525 = vpop.f32.mrb[0].mxu0
      %2526 = vmatprep.mubr.bf16.mxu0 0
      %2527 = vmatmul.mubr.bf16.gmra.mrb[0].mxu0 %v2473
      %v2528 = vpop.f32.mrb[0].mxu0
      %v2529 = vadd.f32 %v2452, %v2528
      %v2530 = vpop.f32.mrb[0].mxu0
      %v2531 = vpop.f32.mrb[0].mxu0
      %v2532 = vadd.f32 %v2452, %v2531
      %v2533 = vpop.f32.mrb[0].mxu0
      %2534 = vmatprep.mubr.bf16.mxu0 0
      %2535 = vmatmul.mubr.bf16.gmra.mrb[0].mxu0 %v2476
      %v2536 = vpop.f32.mrb[0].mxu0
      %v2537 = vadd.f32 %v2452, %v2536
      %v2538 = vpop.f32.mrb[0].mxu0
      %v2539 = vpop.f32.mrb[0].mxu0
      %v2540 = vadd.f32 %v2452, %v2539
      %v2541 = vpop.f32.mrb[0].mxu0
      %2542 = vdwg.mxu0
      %2543 = vst.msk [vmem:[%s253] sm:$0xff] %vm291, %v2513
      %2544 = vst.msk [vmem:[%s253 + $0x8] sm:$0xff] %vm291, %v2516
      %2545 = vst.msk [vmem:[%s253 + $0x10] sm:$0xff] %vm291, %v2521
      %2546 = vst.msk [vmem:[%s253 + $0x18] sm:$0xff] %vm291, %v2524
      %2547 = vst.msk [vmem:[%s253 + $0x20] sm:$0xff] %vm291, %v2529
      %2548 = vst.msk [vmem:[%s253 + $0x28] sm:$0xff] %vm291, %v2532
      %2549 = vst.msk [vmem:[%s253 + $0x30] sm:$0xff] %vm291, %v2537
      %2550 = vst.msk [vmem:[%s253 + $0x38] sm:$0xff] %vm291, %v2540
      %s2551 = smul.u32 8, %s17
      %p2552 = scmp.lt.s32.totalorder %s2551, 15
      %s2553 = scalar_select %p2552, %s2551, 15
      %s2554 = smul.addr %s2553, 8
      %s2555 = scalar_lea.vmem %s6, %s2554
      // Predicated region
      $region45: #{tpu_custom_call.1} parent=43 // pred_check
        %p2556 = pneg %p166
      $region46: #{tpu_custom_call.1} parent=43 // pred_check_branch
        %2558 = sbr.rel (%p2556) target = $region48
      $region47: #{tpu_custom_call.1} parent=43 // pred_region
        %s2559 = smul.u32 8, %s17
      $region48: #{tpu_custom_call.1} parent=43 // pred_fallthru
        _
    $region44: #{tpu_custom_call.1} parent=5 // pred_fallthru
      _
    %p2560 = scmp.le.s32.totalorder 2, %s12
    // Predicated region
    $region49: #{tpu_custom_call.1} parent=5 // pred_check
      %p2561 = pneg %p2560
    $region50: #{tpu_custom_call.1} parent=5 // pred_check_branch
      %2563 = sbr.rel (%p2561) target = $region52
    $region51: #{tpu_custom_call.1} parent=5 // pred_region
      %s2564 = ssub.s32 %s12, 2
      // Predicated region
      $region53: #{tpu_custom_call.1} parent=51 // pred_check
        %p2565 = pneg %p172
      $region54: #{tpu_custom_call.1} parent=51 // pred_check_branch
        %2567 = sbr.rel (%p2565) target = $region56
      $region55: #{tpu_custom_call.1} parent=51 // pred_region
        %s2568 = smul.u32 8, %s18
        %p2569 = scmp.lt.s32.totalorder %s2568, 15
        %s2570 = scalar_select %p2569, %s2568, 15
        %s2571 = smul.addr %s2570, 8
        %s2572 = scalar_lea.vmem %s6, %s2571
      $region56: #{tpu_custom_call.1} parent=51 // pred_fallthru
        _
    $region52: #{tpu_custom_call.1} parent=5 // pred_fallthru
      _
  $region6: #{tpu_custom_call.1} parent=0 // loop_footer
    %s16 = sadd.s32 1, %s12
  $region7: #{tpu_custom_call.1} parent=0 // loop_footer_branch
    %11 = sbr.rel target = $region3
  $region8: #{tpu_custom_call.1} parent=0 // loop_exit
    _

</llo_original>
